<compile_context>
chip_gen: v7x
topology: tpu7x:2x2x1
jax: 0.10.0
libtpu: 0.0.40
codegen_flags: <defaults>
</compile_context>

<pallas_src>
import math

import jax
import jax.numpy as jnp
from jax import lax
from jax.experimental import pallas as pl
from jax.experimental.pallas import tpu as pltpu

# --- small GPT-block config consistent with the PyTorch module ---
N_EMBD = 32          # cfg.n_embd
N_HEAD = 4           # cfg.n_head
HEAD_DIM = N_EMBD // N_HEAD
BLOCK_SIZE = 8       # cfg.block_size (= T)
BATCH = 2
LORA_R = 16
LORA_SCALE = 1.0 / LORA_R     # loralib default lora_alpha=1 -> alpha/r
LN_EPS = 1e-5                 # torch.nn.LayerNorm default
NEG_INF = -1e30               # finite mask value (no inf-inf NaN risk)


def _layernorm(x, g, b):
    mu = jnp.mean(x, axis=-1, keepdims=True)
    var = jnp.mean(jnp.square(x - mu), axis=-1, keepdims=True)
    return (x - mu) * lax.rsqrt(var + LN_EPS) * g + b


def _gelu_tanh(x):
    c = math.sqrt(2.0 / math.pi)
    return 0.5 * x * (1.0 + jnp.tanh(c * (x + 0.044715 * x * x * x)))


def block_kernel(x_ref, vec_ref, wqkv_ref, wao_ref, wfc_ref, wcp_ref, out_ref):
    """One grid step = one batch element (T rows).

    x_ref    : (1, T, C)   f32   activations for this batch element
    vec_ref  : (8, 4C)     f32   packed vector params (lane-dense, one vreg tile):
                                 row0 ln1_g[:C]   row1 ln1_b[:C]
                                 row2 ln2_g[:C]   row3 ln2_b[:C]
                                 row4 attn.c_proj.b[:C]
                                 row5 mlp.c_proj.b[:C]
                                 row6 c_attn bias (q part pre-scaled) [:3C]
                                 row7 mlp.c_fc bias [:4C]
    wqkv_ref : (C, 3C)     bf16  fused q/k/v weights (q columns pre-scaled by 1/sqrt(HD))
    wao_ref  : (C, C)      bf16  attn.c_proj weight
    wfc_ref  : (C, 4C)     bf16  mlp.c_fc weight (LoRA folded in)
    wcp_ref  : (4C, C)     bf16  mlp.c_proj weight (LoRA folded in)
    """
    C = N_EMBD
    x = x_ref[0]                                    # (T, C) f32
    T = x.shape[0]

    vec = vec_ref[...]                              # (8, 4C) f32, one vreg tile
    ln1g, ln1b = vec[0:1, :C], vec[1:2, :C]
    ln2g, ln2b = vec[2:3, :C], vec[3:4, :C]
    bao, bcp = vec[4:5, :C], vec[5:6, :C]
    bqkv = vec[6:7, :3 * C]                         # (1, 3C)
    bfc = vec[7:8, :]                               # (1, 4C)

    # ---------------- ln_1 + causal multi-head self-attention ----------------
    h = _layernorm(x, ln1g, ln1b)
    h_bf = h.astype(jnp.bfloat16)

    # Fused QKV projection: one lane-dense (T,C)@(C,3C) matmul.
    qkv = jnp.dot(h_bf, wqkv_ref[...], preferred_element_type=jnp.float32) + bqkv

    # Additive causal bias (built once per grid step; scale already folded
    # into the Q weights/bias host-side).
    row = lax.broadcasted_iota(jnp.int32, (T, T), 0)
    col = lax.broadcasted_iota(jnp.int32, (T, T), 1)
    causal = jnp.where(col <= row, 0.0, NEG_INF)    # (T, T) f32

    ys = []
    for hd in range(N_HEAD):                        # static unroll over heads
        q = qkv[:, hd * HEAD_DIM:(hd + 1) * HEAD_DIM]
        k = qkv[:, C + hd * HEAD_DIM: C + (hd + 1) * HEAD_DIM]
        v = qkv[:, 2 * C + hd * HEAD_DIM: 2 * C + (hd + 1) * HEAD_DIM]

        att = jnp.dot(q, k.T, preferred_element_type=jnp.float32) + causal
        att = att - jnp.max(att, axis=-1, keepdims=True)
        p = jnp.exp(att)
        p = p * pl.reciprocal(jnp.sum(p, axis=-1, keepdims=True), approx=True)
        ys.append(jnp.dot(p, v, preferred_element_type=jnp.float32))   # (T, HD)

    y = jnp.concatenate(ys, axis=-1)                # (T, C)
    # Fused output projection: one (T,C)@(C,C) matmul instead of 4 per-head.
    attn_out = jnp.dot(y.astype(jnp.bfloat16), wao_ref[...],
                       preferred_element_type=jnp.float32) + bao
    # TODO(synk): the attention-probability side buffer (self.atten) is stored
    # as a module attribute in PyTorch but never returned by Block.forward;
    # it is not emitted here.

    x1 = x + attn_out                               # first residual

    # ------------- ln_2 + MLP (LoRA pre-folded into base weights) -------------
    h2 = _layernorm(x1, ln2g, ln2b)
    fc = jnp.dot(h2.astype(jnp.bfloat16), wfc_ref[...],
                 preferred_element_type=jnp.float32) + bfc
    g = _gelu_tanh(fc)
    cp = jnp.dot(g.astype(jnp.bfloat16), wcp_ref[...],
                 preferred_element_type=jnp.float32) + bcp

    out_ref[0] = x1 + cp                            # second residual


@jax.jit
def block_forward(x, params):
    (ln1g, ln1b, wqkv, bqkv, wao, bao, ln2g, ln2b,
     wfc, bfc, afc, bfcB, wcp, bcp, acp, bcpB) = params
    B, T, C = x.shape
    H4 = 4 * C

    # ---- host-side (XLA) prep: LoRA fold, scale fold, packed params ----
    wfc_eff = (wfc + (afc @ bfcB) * LORA_SCALE).astype(jnp.bfloat16)
    wcp_eff = (wcp + (acp @ bcpB) * LORA_SCALE).astype(jnp.bfloat16)

    # Fold 1/sqrt(HEAD_DIM) into the Q columns of the fused QKV weight/bias.
    scale = 1.0 / math.sqrt(HEAD_DIM)
    wqkv_s = wqkv.at[:, :C].multiply(scale).astype(jnp.bfloat16)   # (C, 3C) bf16
    bqkv_s = bqkv.at[:, :C].multiply(scale)                        # (1, 3C) f32
    wao_bf = wao.astype(jnp.bfloat16)                              # (C, C) bf16

    # One lane-dense (8, 4C) = (8, 128) f32 slab holding every vector param.
    vec = jnp.zeros((8, H4), jnp.float32)
    vec = vec.at[0, :C].set(ln1g[0])
    vec = vec.at[1, :C].set(ln1b[0])
    vec = vec.at[2, :C].set(ln2g[0])
    vec = vec.at[3, :C].set(ln2b[0])
    vec = vec.at[4, :C].set(bao[0])
    vec = vec.at[5, :C].set(bcp[0])
    vec = vec.at[6, :3 * C].set(bqkv_s[0])
    vec = vec.at[7, :].set(bfc[0])

    # Grid over the batch: on v7x the two TensorCores each take a batch
    # element ("parallel"); on v5e/v6e this is a cheap 2-step loop.
    # TODO(synk): at realistic GPT sizes, switch to a row-tiled grid over B*T
    # with resident weights instead of whole-problem-in-VMEM.
    out = pl.pallas_call(
        block_kernel,
        out_shape=jax.ShapeDtypeStruct((B, T, C), x.dtype),
        grid=(B,),
        in_specs=[
            pl.BlockSpec((1, T, C), lambda b: (b, 0, 0)),     # x (per batch)
            pl.BlockSpec((8, H4), lambda b: (0, 0)),          # packed vec params
            pl.BlockSpec((C, 3 * C), lambda b: (0, 0)),       # fused qkv weight
            pl.BlockSpec((C, C), lambda b: (0, 0)),           # attn out proj
            pl.BlockSpec((C, H4), lambda b: (0, 0)),          # mlp c_fc
            pl.BlockSpec((H4, C), lambda b: (0, 0)),          # mlp c_proj
        ],
        out_specs=pl.BlockSpec((1, T, C), lambda b: (b, 0, 0)),
        compiler_params=pltpu.CompilerParams(
            dimension_semantics=("parallel",)),
    )(x, vec, wqkv_s, wao_bf, wfc_eff, wcp_eff)
    return out


def make_params(key):
    ks = jax.random.split(key, 16)

    def rnd(k, shape, scale=0.02):
        return (scale * jax.random.normal(k, shape)).astype(jnp.float32)

    C, H4, R = N_EMBD, 4 * N_EMBD, LORA_R
    params = (
        # ln_1 gamma / beta (1, C)
        (1.0 + rnd(ks[0], (1, C), 0.1)), rnd(ks[1], (1, C), 0.1),
        # attn.c_attn: (C, 3C) weight, (1, 3C) bias
        rnd(ks[2], (C, 3 * C)), rnd(ks[3], (1, 3 * C)),
        # attn.c_proj: (C, C), (1, C)
        rnd(ks[4], (C, C)), rnd(ks[5], (1, C)),
        # ln_2 gamma / beta
        (1.0 + rnd(ks[6], (1, C), 0.1)), rnd(ks[7], (1, C), 0.1),
        # mlp.c_fc: W (C, 4C), b (1, 4C), lora_A^T (C, r), lora_B^T (r, 4C)
        rnd(ks[8], (C, H4)), rnd(ks[9], (1, H4)),
        rnd(ks[10], (C, R)), rnd(ks[11], (R, H4)),
        # mlp.c_proj: W (4C, C), b (1, C), lora_A^T (4C, r), lora_B^T (r, C)
        rnd(ks[12], (H4, C)), rnd(ks[13], (1, C)),
        rnd(ks[14], (H4, R)), rnd(ks[15], (R, C)),
    )
    return params


def reference(x, params):
    (ln1g, ln1b, wqkv, bqkv, wao, bao, ln2g, ln2b,
     wfc, bfc, afc, bfcB, wcp, bcp, acp, bcpB) = params

    def ln(t, g, b):
        mu = t.mean(-1, keepdims=True)
        var = ((t - mu) ** 2).mean(-1, keepdims=True)
        return (t - mu) / jnp.sqrt(var + LN_EPS) * g[0] + b[0]

    B, T, C = x.shape
    h = ln(x, ln1g, ln1b)
    qkv = h @ wqkv + bqkv[0]
    q, k, v = jnp.split(qkv, 3, axis=-1)

    def heads(t):
        return t.reshape(B, T, N_HEAD, HEAD_DIM).transpose(0, 2, 1, 3)

    q, k, v = heads(q), heads(k), heads(v)
    att = (q @ k.transpose(0, 1, 3, 2)) * (1.0 / math.sqrt(HEAD_DIM))
    mask = jnp.tril(jnp.ones((T, T), bool))
    att = jnp.where(mask, att, -jnp.inf)
    att = jax.nn.softmax(att, axis=-1)
    y = (att @ v).transpose(0, 2, 1, 3).reshape(B, T, C)
    x1 = x + y @ wao + bao[0]

    h2 = ln(x1, ln2g, ln2b)
    fc = h2 @ wfc + bfc[0] + (h2 @ afc @ bfcB) * LORA_SCALE
    g = 0.5 * fc * (1.0 + jnp.tanh(math.sqrt(2.0 / math.pi) * (fc + 0.044715 * fc ** 3)))
    cp = g @ wcp + bcp[0] + (g @ acp @ bcpB) * LORA_SCALE
    return x1 + cp


if __name__ == "__main__":
    key = jax.random.PRNGKey(0)
    kx, kp = jax.random.split(key)
    x = jax.random.normal(kx, (BATCH, BLOCK_SIZE, N_EMBD), dtype=jnp.float32)
    params = make_params(kp)

    out = jax.block_until_ready(block_forward(x, params))
    ref = jax.block_until_ready(reference(x, params))

    assert out.shape == x.shape and out.dtype == jnp.float32
    # Tolerance loosened vs the f32 reference because matmul operands are bf16
    # (accumulation stays f32) and the softmax denominator uses the EUP
    # approximate reciprocal; structural errors would be orders larger.
    assert jnp.allclose(out, ref, rtol=1e-2, atol=3e-3), "mismatch vs reference"
    print("KERNEL_OK")
</pallas_src>

<mosaic_0001>
module attributes {stable_mosaic.version = 11 : i64} {
  func.func @block_kernel(%arg0: i32, %arg1: memref<1x8x32xf32, #tpu.memory_space<vmem>>, %arg2: memref<8x128xf32, #tpu.memory_space<vmem>>, %arg3: memref<32x96xbf16, #tpu.memory_space<vmem>>, %arg4: memref<32x32xbf16, #tpu.memory_space<vmem>>, %arg5: memref<32x128xbf16, #tpu.memory_space<vmem>>, %arg6: memref<128x32xbf16, #tpu.memory_space<vmem>>, %arg7: memref<1x8x32xf32, #tpu.memory_space<vmem>>) attributes {dimension_semantics = [#tpu.dimension_semantics<parallel>], iteration_bounds = array<i64: 2>, scalar_prefetch = 0 : i64, scratch_operands = 0 : i64, tpu.core_type = #tpu.core_type<tc>, window_params = [{transform_indices = @transform_0, window_bounds = array<i64: 1, 8, 32>}, {pipeline_mode = #tpu.pipeline_mode<synchronous>, transform_indices = @transform_1, window_bounds = array<i64: 8, 128>}, {pipeline_mode = #tpu.pipeline_mode<synchronous>, transform_indices = @transform_2, window_bounds = array<i64: 32, 96>}, {pipeline_mode = #tpu.pipeline_mode<synchronous>, transform_indices = @transform_3, window_bounds = array<i64: 32, 32>}, {pipeline_mode = #tpu.pipeline_mode<synchronous>, transform_indices = @transform_4, window_bounds = array<i64: 32, 128>}, {pipeline_mode = #tpu.pipeline_mode<synchronous>, transform_indices = @transform_5, window_bounds = array<i64: 128, 32>}, {transform_indices = @transform_6, window_bounds = array<i64: 1, 8, 32>}]} {
    %c0 = arith.constant 0 : index
    %c0_0 = arith.constant 0 : index
    %c0_1 = arith.constant 0 : index
    %0 = vector.load %arg1[%c0, %c0_0, %c0_1] : memref<1x8x32xf32, #tpu.memory_space<vmem>>, vector<1x8x32xf32>
    %1 = vector.shape_cast %0 : vector<1x8x32xf32> to vector<8x32xf32>
    %c0_2 = arith.constant 0 : index
    %c0_3 = arith.constant 0 : index
    %2 = vector.load %arg2[%c0_2, %c0_3] : memref<8x128xf32, #tpu.memory_space<vmem>>, vector<8x128xf32>
    %3 = vector.extract_strided_slice %2 {offsets = [0, 0], sizes = [1, 32], strides = [1, 1]} : vector<8x128xf32> to vector<1x32xf32>
    %4 = vector.extract_strided_slice %2 {offsets = [1, 0], sizes = [1, 32], strides = [1, 1]} : vector<8x128xf32> to vector<1x32xf32>
    %5 = vector.extract_strided_slice %2 {offsets = [2, 0], sizes = [1, 32], strides = [1, 1]} : vector<8x128xf32> to vector<1x32xf32>
    %6 = vector.extract_strided_slice %2 {offsets = [3, 0], sizes = [1, 32], strides = [1, 1]} : vector<8x128xf32> to vector<1x32xf32>
    %7 = vector.extract_strided_slice %2 {offsets = [4, 0], sizes = [1, 32], strides = [1, 1]} : vector<8x128xf32> to vector<1x32xf32>
    %8 = vector.extract_strided_slice %2 {offsets = [5, 0], sizes = [1, 32], strides = [1, 1]} : vector<8x128xf32> to vector<1x32xf32>
    %9 = vector.extract_strided_slice %2 {offsets = [6, 0], sizes = [1, 96], strides = [1, 1]} : vector<8x128xf32> to vector<1x96xf32>
    %10 = vector.extract_strided_slice %2 {offsets = [7, 0], sizes = [1, 128], strides = [1, 1]} : vector<8x128xf32> to vector<1x128xf32>
    %cst = arith.constant dense<0.000000e+00> : vector<8xf32>
    %11 = vector.multi_reduction <add>, %1, %cst [1] : vector<8x32xf32> to vector<8xf32>
    %12 = vector.shape_cast %11 : vector<8xf32> to vector<8x1xf32>
    %cst_4 = arith.constant 3.200000e+01 : f32
    %13 = vector.broadcast %cst_4 : f32 to vector<8x1xf32>
    %14 = arith.divf %12, %13 : vector<8x1xf32>
    %15 = vector.broadcast %14 : vector<8x1xf32> to vector<8x32xf32>
    %16 = arith.subf %1, %15 : vector<8x32xf32>
    %17 = arith.mulf %16, %16 : vector<8x32xf32>
    %cst_5 = arith.constant dense<0.000000e+00> : vector<8xf32>
    %18 = vector.multi_reduction <add>, %17, %cst_5 [1] : vector<8x32xf32> to vector<8xf32>
    %19 = vector.shape_cast %18 : vector<8xf32> to vector<8x1xf32>
    %cst_6 = arith.constant 3.200000e+01 : f32
    %20 = vector.broadcast %cst_6 : f32 to vector<8x1xf32>
    %21 = arith.divf %19, %20 : vector<8x1xf32>
    %22 = vector.broadcast %14 : vector<8x1xf32> to vector<8x32xf32>
    %23 = arith.subf %1, %22 : vector<8x32xf32>
    %cst_7 = arith.constant 9.99999974E-6 : f32
    %24 = vector.broadcast %cst_7 : f32 to vector<8x1xf32>
    %25 = arith.addf %21, %24 : vector<8x1xf32>
    %26 = math.rsqrt %25 : vector<8x1xf32>
    %27 = vector.broadcast %26 : vector<8x1xf32> to vector<8x32xf32>
    %28 = arith.mulf %23, %27 : vector<8x32xf32>
    %29 = vector.broadcast %3 : vector<1x32xf32> to vector<8x32xf32>
    %30 = arith.mulf %28, %29 : vector<8x32xf32>
    %31 = vector.broadcast %4 : vector<1x32xf32> to vector<8x32xf32>
    %32 = arith.addf %30, %31 : vector<8x32xf32>
    %33 = arith.truncf %32 : vector<8x32xf32> to vector<8x32xbf16>
    %c0_8 = arith.constant 0 : index
    %c0_9 = arith.constant 0 : index
    %34 = vector.load %arg3[%c0_8, %c0_9] : memref<32x96xbf16, #tpu.memory_space<vmem>>, vector<32x96xbf16>
    %cst_10 = arith.constant dense<0.000000e+00> : vector<8x96xf32>
    %35 = tpu.matmul %33, %34, %cst_10 {dimension_numbers = #tpu.dot_dimension_numbers<[1], [0], [0], [1], [0, 0, 1, 1], [], []>} : vector<8x32xbf16>, vector<32x96xbf16>, vector<8x96xf32> -> vector<8x96xf32>
    %36 = vector.broadcast %9 : vector<1x96xf32> to vector<8x96xf32>
    %37 = arith.addf %35, %36 : vector<8x96xf32>
    %38 = tpu.iota {dimensions = array<i32: 0>} : vector<8x8xi32>
    %39 = tpu.iota {dimensions = array<i32: 1>} : vector<8x8xi32>
    %40 = arith.cmpi sle, %39, %38 : vector<8x8xi32>
    %cst_11 = arith.constant 0.000000e+00 : f32
    %cst_12 = arith.constant -1.000000e+30 : f32
    %41 = vector.broadcast %cst_11 : f32 to vector<8x8xf32>
    %42 = vector.broadcast %cst_12 : f32 to vector<8x8xf32>
    %43 = arith.select %40, %41, %42 : vector<8x8xi1>, vector<8x8xf32>
    %44 = vector.extract_strided_slice %37 {offsets = [0, 0], sizes = [8, 8], strides = [1, 1]} : vector<8x96xf32> to vector<8x8xf32>
    %45 = vector.extract_strided_slice %37 {offsets = [0, 32], sizes = [8, 8], strides = [1, 1]} : vector<8x96xf32> to vector<8x8xf32>
    %46 = vector.extract_strided_slice %37 {offsets = [0, 64], sizes = [8, 8], strides = [1, 1]} : vector<8x96xf32> to vector<8x8xf32>
    %47 = tpu.transpose %45, [1, 0] : vector<8x8xf32> -> vector<8x8xf32>
    %cst_13 = arith.constant dense<0.000000e+00> : vector<8x8xf32>
    %48 = tpu.matmul %44, %47, %cst_13 {dimension_numbers = #tpu.dot_dimension_numbers<[1], [0], [0], [1], [0, 0, 1, 1], [], []>} : vector<8x8xf32>, vector<8x8xf32>, vector<8x8xf32> -> vector<8x8xf32>
    %49 = arith.addf %48, %43 : vector<8x8xf32>
    %cst_14 = arith.constant dense<0xFF800000> : vector<8xf32>
    %50 = vector.multi_reduction <maximumf>, %49, %cst_14 [1] : vector<8x8xf32> to vector<8xf32>
    %51 = vector.shape_cast %50 : vector<8xf32> to vector<8x1xf32>
    %52 = vector.broadcast %51 : vector<8x1xf32> to vector<8x8xf32>
    %53 = arith.subf %49, %52 : vector<8x8xf32>
    %54 = math.exp %53 : vector<8x8xf32>
    %cst_15 = arith.constant dense<0.000000e+00> : vector<8xf32>
    %55 = vector.multi_reduction <add>, %54, %cst_15 [1] : vector<8x8xf32> to vector<8xf32>
    %56 = vector.shape_cast %55 : vector<8xf32> to vector<8x1xf32>
    %57 = tpu.reciprocal %56 {approx = true} : vector<8x1xf32> -> vector<8x1xf32>
    %58 = vector.broadcast %57 : vector<8x1xf32> to vector<8x8xf32>
    %59 = arith.mulf %54, %58 : vector<8x8xf32>
    %cst_16 = arith.constant dense<0.000000e+00> : vector<8x8xf32>
    %60 = tpu.matmul %59, %46, %cst_16 {dimension_numbers = #tpu.dot_dimension_numbers<[1], [0], [0], [1], [0, 0, 1, 1], [], []>} : vector<8x8xf32>, vector<8x8xf32>, vector<8x8xf32> -> vector<8x8xf32>
    %61 = vector.extract_strided_slice %37 {offsets = [0, 8], sizes = [8, 8], strides = [1, 1]} : vector<8x96xf32> to vector<8x8xf32>
    %62 = vector.extract_strided_slice %37 {offsets = [0, 40], sizes = [8, 8], strides = [1, 1]} : vector<8x96xf32> to vector<8x8xf32>
    %63 = vector.extract_strided_slice %37 {offsets = [0, 72], sizes = [8, 8], strides = [1, 1]} : vector<8x96xf32> to vector<8x8xf32>
    %64 = tpu.transpose %62, [1, 0] : vector<8x8xf32> -> vector<8x8xf32>
    %cst_17 = arith.constant dense<0.000000e+00> : vector<8x8xf32>
    %65 = tpu.matmul %61, %64, %cst_17 {dimension_numbers = #tpu.dot_dimension_numbers<[1], [0], [0], [1], [0, 0, 1, 1], [], []>} : vector<8x8xf32>, vector<8x8xf32>, vector<8x8xf32> -> vector<8x8xf32>
    %66 = arith.addf %65, %43 : vector<8x8xf32>
    %cst_18 = arith.constant dense<0xFF800000> : vector<8xf32>
    %67 = vector.multi_reduction <maximumf>, %66, %cst_18 [1] : vector<8x8xf32> to vector<8xf32>
    %68 = vector.shape_cast %67 : vector<8xf32> to vector<8x1xf32>
    %69 = vector.broadcast %68 : vector<8x1xf32> to vector<8x8xf32>
    %70 = arith.subf %66, %69 : vector<8x8xf32>
    %71 = math.exp %70 : vector<8x8xf32>
    %cst_19 = arith.constant dense<0.000000e+00> : vector<8xf32>
    %72 = vector.multi_reduction <add>, %71, %cst_19 [1] : vector<8x8xf32> to vector<8xf32>
    %73 = vector.shape_cast %72 : vector<8xf32> to vector<8x1xf32>
    %74 = tpu.reciprocal %73 {approx = true} : vector<8x1xf32> -> vector<8x1xf32>
    %75 = vector.broadcast %74 : vector<8x1xf32> to vector<8x8xf32>
    %76 = arith.mulf %71, %75 : vector<8x8xf32>
    %cst_20 = arith.constant dense<0.000000e+00> : vector<8x8xf32>
    %77 = tpu.matmul %76, %63, %cst_20 {dimension_numbers = #tpu.dot_dimension_numbers<[1], [0], [0], [1], [0, 0, 1, 1], [], []>} : vector<8x8xf32>, vector<8x8xf32>, vector<8x8xf32> -> vector<8x8xf32>
    %78 = vector.extract_strided_slice %37 {offsets = [0, 16], sizes = [8, 8], strides = [1, 1]} : vector<8x96xf32> to vector<8x8xf32>
    %79 = vector.extract_strided_slice %37 {offsets = [0, 48], sizes = [8, 8], strides = [1, 1]} : vector<8x96xf32> to vector<8x8xf32>
    %80 = vector.extract_strided_slice %37 {offsets = [0, 80], sizes = [8, 8], strides = [1, 1]} : vector<8x96xf32> to vector<8x8xf32>
    %81 = tpu.transpose %79, [1, 0] : vector<8x8xf32> -> vector<8x8xf32>
    %cst_21 = arith.constant dense<0.000000e+00> : vector<8x8xf32>
    %82 = tpu.matmul %78, %81, %cst_21 {dimension_numbers = #tpu.dot_dimension_numbers<[1], [0], [0], [1], [0, 0, 1, 1], [], []>} : vector<8x8xf32>, vector<8x8xf32>, vector<8x8xf32> -> vector<8x8xf32>
    %83 = arith.addf %82, %43 : vector<8x8xf32>
    %cst_22 = arith.constant dense<0xFF800000> : vector<8xf32>
    %84 = vector.multi_reduction <maximumf>, %83, %cst_22 [1] : vector<8x8xf32> to vector<8xf32>
    %85 = vector.shape_cast %84 : vector<8xf32> to vector<8x1xf32>
    %86 = vector.broadcast %85 : vector<8x1xf32> to vector<8x8xf32>
    %87 = arith.subf %83, %86 : vector<8x8xf32>
    %88 = math.exp %87 : vector<8x8xf32>
    %cst_23 = arith.constant dense<0.000000e+00> : vector<8xf32>
    %89 = vector.multi_reduction <add>, %88, %cst_23 [1] : vector<8x8xf32> to vector<8xf32>
    %90 = vector.shape_cast %89 : vector<8xf32> to vector<8x1xf32>
    %91 = tpu.reciprocal %90 {approx = true} : vector<8x1xf32> -> vector<8x1xf32>
    %92 = vector.broadcast %91 : vector<8x1xf32> to vector<8x8xf32>
    %93 = arith.mulf %88, %92 : vector<8x8xf32>
    %cst_24 = arith.constant dense<0.000000e+00> : vector<8x8xf32>
    %94 = tpu.matmul %93, %80, %cst_24 {dimension_numbers = #tpu.dot_dimension_numbers<[1], [0], [0], [1], [0, 0, 1, 1], [], []>} : vector<8x8xf32>, vector<8x8xf32>, vector<8x8xf32> -> vector<8x8xf32>
    %95 = vector.extract_strided_slice %37 {offsets = [0, 24], sizes = [8, 8], strides = [1, 1]} : vector<8x96xf32> to vector<8x8xf32>
    %96 = vector.extract_strided_slice %37 {offsets = [0, 56], sizes = [8, 8], strides = [1, 1]} : vector<8x96xf32> to vector<8x8xf32>
    %97 = vector.extract_strided_slice %37 {offsets = [0, 88], sizes = [8, 8], strides = [1, 1]} : vector<8x96xf32> to vector<8x8xf32>
    %98 = tpu.transpose %96, [1, 0] : vector<8x8xf32> -> vector<8x8xf32>
    %cst_25 = arith.constant dense<0.000000e+00> : vector<8x8xf32>
    %99 = tpu.matmul %95, %98, %cst_25 {dimension_numbers = #tpu.dot_dimension_numbers<[1], [0], [0], [1], [0, 0, 1, 1], [], []>} : vector<8x8xf32>, vector<8x8xf32>, vector<8x8xf32> -> vector<8x8xf32>
    %100 = arith.addf %99, %43 : vector<8x8xf32>
    %cst_26 = arith.constant dense<0xFF800000> : vector<8xf32>
    %101 = vector.multi_reduction <maximumf>, %100, %cst_26 [1] : vector<8x8xf32> to vector<8xf32>
    %102 = vector.shape_cast %101 : vector<8xf32> to vector<8x1xf32>
    %103 = vector.broadcast %102 : vector<8x1xf32> to vector<8x8xf32>
    %104 = arith.subf %100, %103 : vector<8x8xf32>
    %105 = math.exp %104 : vector<8x8xf32>
    %cst_27 = arith.constant dense<0.000000e+00> : vector<8xf32>
    %106 = vector.multi_reduction <add>, %105, %cst_27 [1] : vector<8x8xf32> to vector<8xf32>
    %107 = vector.shape_cast %106 : vector<8xf32> to vector<8x1xf32>
    %108 = tpu.reciprocal %107 {approx = true} : vector<8x1xf32> -> vector<8x1xf32>
    %109 = vector.broadcast %108 : vector<8x1xf32> to vector<8x8xf32>
    %110 = arith.mulf %105, %109 : vector<8x8xf32>
    %cst_28 = arith.constant dense<0.000000e+00> : vector<8x8xf32>
    %111 = tpu.matmul %110, %97, %cst_28 {dimension_numbers = #tpu.dot_dimension_numbers<[1], [0], [0], [1], [0, 0, 1, 1], [], []>} : vector<8x8xf32>, vector<8x8xf32>, vector<8x8xf32> -> vector<8x8xf32>
    %112 = tpu.concatenate %60, %77, %94, %111 in 1 : vector<8x8xf32>, vector<8x8xf32>, vector<8x8xf32>, vector<8x8xf32> -> vector<8x32xf32>
    %113 = arith.truncf %112 : vector<8x32xf32> to vector<8x32xbf16>
    %c0_29 = arith.constant 0 : index
    %c0_30 = arith.constant 0 : index
    %114 = vector.load %arg4[%c0_29, %c0_30] : memref<32x32xbf16, #tpu.memory_space<vmem>>, vector<32x32xbf16>
    %cst_31 = arith.constant dense<0.000000e+00> : vector<8x32xf32>
    %115 = tpu.matmul %113, %114, %cst_31 {dimension_numbers = #tpu.dot_dimension_numbers<[1], [0], [0], [1], [0, 0, 1, 1], [], []>} : vector<8x32xbf16>, vector<32x32xbf16>, vector<8x32xf32> -> vector<8x32xf32>
    %116 = vector.broadcast %7 : vector<1x32xf32> to vector<8x32xf32>
    %117 = arith.addf %115, %116 : vector<8x32xf32>
    %118 = arith.addf %1, %117 : vector<8x32xf32>
    %cst_32 = arith.constant dense<0.000000e+00> : vector<8xf32>
    %119 = vector.multi_reduction <add>, %118, %cst_32 [1] : vector<8x32xf32> to vector<8xf32>
    %120 = vector.shape_cast %119 : vector<8xf32> to vector<8x1xf32>
    %cst_33 = arith.constant 3.200000e+01 : f32
    %121 = vector.broadcast %cst_33 : f32 to vector<8x1xf32>
    %122 = arith.divf %120, %121 : vector<8x1xf32>
    %123 = vector.broadcast %122 : vector<8x1xf32> to vector<8x32xf32>
    %124 = arith.subf %118, %123 : vector<8x32xf32>
    %125 = arith.mulf %124, %124 : vector<8x32xf32>
    %cst_34 = arith.constant dense<0.000000e+00> : vector<8xf32>
    %126 = vector.multi_reduction <add>, %125, %cst_34 [1] : vector<8x32xf32> to vector<8xf32>
    %127 = vector.shape_cast %126 : vector<8xf32> to vector<8x1xf32>
    %cst_35 = arith.constant 3.200000e+01 : f32
    %128 = vector.broadcast %cst_35 : f32 to vector<8x1xf32>
    %129 = arith.divf %127, %128 : vector<8x1xf32>
    %130 = vector.broadcast %122 : vector<8x1xf32> to vector<8x32xf32>
    %131 = arith.subf %118, %130 : vector<8x32xf32>
    %cst_36 = arith.constant 9.99999974E-6 : f32
    %132 = vector.broadcast %cst_36 : f32 to vector<8x1xf32>
    %133 = arith.addf %129, %132 : vector<8x1xf32>
    %134 = math.rsqrt %133 : vector<8x1xf32>
    %135 = vector.broadcast %134 : vector<8x1xf32> to vector<8x32xf32>
    %136 = arith.mulf %131, %135 : vector<8x32xf32>
    %137 = vector.broadcast %5 : vector<1x32xf32> to vector<8x32xf32>
    %138 = arith.mulf %136, %137 : vector<8x32xf32>
    %139 = vector.broadcast %6 : vector<1x32xf32> to vector<8x32xf32>
    %140 = arith.addf %138, %139 : vector<8x32xf32>
    %141 = arith.truncf %140 : vector<8x32xf32> to vector<8x32xbf16>
    %c0_37 = arith.constant 0 : index
    %c0_38 = arith.constant 0 : index
    %142 = vector.load %arg5[%c0_37, %c0_38] : memref<32x128xbf16, #tpu.memory_space<vmem>>, vector<32x128xbf16>
    %cst_39 = arith.constant dense<0.000000e+00> : vector<8x128xf32>
    %143 = tpu.matmul %141, %142, %cst_39 {dimension_numbers = #tpu.dot_dimension_numbers<[1], [0], [0], [1], [0, 0, 1, 1], [], []>} : vector<8x32xbf16>, vector<32x128xbf16>, vector<8x128xf32> -> vector<8x128xf32>
    %144 = vector.broadcast %10 : vector<1x128xf32> to vector<8x128xf32>
    %145 = arith.addf %143, %144 : vector<8x128xf32>
    %cst_40 = arith.constant 5.000000e-01 : f32
    %146 = vector.broadcast %cst_40 : f32 to vector<8x128xf32>
    %147 = arith.mulf %146, %145 : vector<8x128xf32>
    %cst_41 = arith.constant 4.471500e-02 : f32
    %148 = vector.broadcast %cst_41 : f32 to vector<8x128xf32>
    %149 = arith.mulf %148, %145 : vector<8x128xf32>
    %150 = arith.mulf %149, %145 : vector<8x128xf32>
    %151 = arith.mulf %150, %145 : vector<8x128xf32>
    %152 = arith.addf %145, %151 : vector<8x128xf32>
    %cst_42 = arith.constant 0.797884583 : f32
    %153 = vector.broadcast %cst_42 : f32 to vector<8x128xf32>
    %154 = arith.mulf %153, %152 : vector<8x128xf32>
    %155 = math.tanh %154 : vector<8x128xf32>
    %cst_43 = arith.constant 1.000000e+00 : f32
    %156 = vector.broadcast %cst_43 : f32 to vector<8x128xf32>
    %157 = arith.addf %156, %155 : vector<8x128xf32>
    %158 = arith.mulf %147, %157 : vector<8x128xf32>
    %159 = arith.truncf %158 : vector<8x128xf32> to vector<8x128xbf16>
    %c0_44 = arith.constant 0 : index
    %c0_45 = arith.constant 0 : index
    %160 = vector.load %arg6[%c0_44, %c0_45] : memref<128x32xbf16, #tpu.memory_space<vmem>>, vector<128x32xbf16>
    %cst_46 = arith.constant dense<0.000000e+00> : vector<8x32xf32>
    %161 = tpu.matmul %159, %160, %cst_46 {dimension_numbers = #tpu.dot_dimension_numbers<[1], [0], [0], [1], [0, 0, 1, 1], [], []>} : vector<8x128xbf16>, vector<128x32xbf16>, vector<8x32xf32> -> vector<8x32xf32>
    %162 = vector.broadcast %8 : vector<1x32xf32> to vector<8x32xf32>
    %163 = arith.addf %161, %162 : vector<8x32xf32>
    %164 = arith.addf %118, %163 : vector<8x32xf32>
    %c0_47 = arith.constant 0 : index
    %c0_48 = arith.constant 0 : index
    %c0_49 = arith.constant 0 : index
    %165 = vector.load %arg7[%c0_47, %c0_48, %c0_49] : memref<1x8x32xf32, #tpu.memory_space<vmem>>, vector<1x8x32xf32>
    %166 = vector.shape_cast %165 : vector<1x8x32xf32> to vector<8x32xf32>
    %167 = vector.shape_cast %164 : vector<8x32xf32> to vector<1x8x32xf32>
    tpu.vector_store %arg7[%c0_47, %c0_48, %c0_49], %167 {strides = array<i32>} : memref<1x8x32xf32, #tpu.memory_space<vmem>>, vector<1x8x32xf32>,
    return
  }
  func.func @transform_0(%arg0: i32) -> (i32, i32, i32) {
    %c0_i32 = arith.constant 0 : i32
    %c0_i32_0 = arith.constant 0 : i32
    %c0_i32_1 = arith.constant 0 : i32
    return %arg0, %c0_i32, %c0_i32_0 : i32, i32, i32
  }
  func.func @transform_1(%arg0: i32) -> (i32, i32) {
    %c0_i32 = arith.constant 0 : i32
    %c0_i32_0 = arith.constant 0 : i32
    %c0_i32_1 = arith.constant 0 : i32
    return %c0_i32, %c0_i32_0 : i32, i32
  }
  func.func @transform_2(%arg0: i32) -> (i32, i32) {
    %c0_i32 = arith.constant 0 : i32
    %c0_i32_0 = arith.constant 0 : i32
    %c0_i32_1 = arith.constant 0 : i32
    return %c0_i32, %c0_i32_0 : i32, i32
  }
  func.func @transform_3(%arg0: i32) -> (i32, i32) {
    %c0_i32 = arith.constant 0 : i32
    %c0_i32_0 = arith.constant 0 : i32
    %c0_i32_1 = arith.constant 0 : i32
    return %c0_i32, %c0_i32_0 : i32, i32
  }
  func.func @transform_4(%arg0: i32) -> (i32, i32) {
    %c0_i32 = arith.constant 0 : i32
    %c0_i32_0 = arith.constant 0 : i32
    %c0_i32_1 = arith.constant 0 : i32
    return %c0_i32, %c0_i32_0 : i32, i32
  }
  func.func @transform_5(%arg0: i32) -> (i32, i32) {
    %c0_i32 = arith.constant 0 : i32
    %c0_i32_0 = arith.constant 0 : i32
    %c0_i32_1 = arith.constant 0 : i32
    return %c0_i32, %c0_i32_0 : i32, i32
  }
  func.func @transform_6(%arg0: i32) -> (i32, i32, i32) {
    %c0_i32 = arith.constant 0 : i32
    %c0_i32_0 = arith.constant 0 : i32
    %c0_i32_1 = arith.constant 0 : i32
    return %arg0, %c0_i32, %c0_i32_0 : i32, i32, i32
  }
}

</mosaic_0001>

<llo_original>
// kernel: block_forward.1
$region0: #{block_forward.1}
  #allocation0 [shape = 'u32[]', space=smem, size = 0x4, offset = 0x4, fixed_abs, tag = 'smem constant byte address 0x4 - core index']
  #allocation1 [shape = 'u32[144,128]{1,0:T(1,128)}', space=vmem, size = 0x12000, scoped, tag = 'internal scratch']
  %s0 = inlined_call_operand.vmem [shape: f32[2,8,32], index: 0, kind: input, shape index: {}]
  %s1 = inlined_call_operand.vmem [shape: f32[8,128], index: 1, kind: input, shape index: {}]
  %s2 = inlined_call_operand.vmem [shape: bf16[32,96], index: 2, kind: input, shape index: {}]
  %s3 = inlined_call_operand.vmem [shape: bf16[32,32], index: 3, kind: input, shape index: {}]
  %s4 = inlined_call_operand.vmem [shape: bf16[32,128], index: 4, kind: input, shape index: {}]
  %s5 = inlined_call_operand.vmem [shape: bf16[128,32], index: 5, kind: input, shape index: {}]
  %s6 = inlined_call_operand.hbm [shape: f32[2,8,32], index: 6, kind: output, shape index: {}]
  %s7 = sld [smem:[#allocation0]]
  $region57: #{block_forward.1} parent=0
    _
  %s9 = ssub.s32 1, %s7
  %s10 = scalar_select 0, %s9, %s7
  $region1: #{block_forward.1} parent=0
    #allocation2 [shape = 'u8[8192]{0}', space=vmem, size = 0x2000, scoped, tag = 'output window, operand 0']
    #allocation3 [shape = 's32[2]{0}', space=sflag, size = 0x8, scoped, tag = 'scoped memory for block_forward.1']
    %11 = vsyncpa [#allocation3], 0
    %s12 = scalar_lea.sflag [#allocation3], 1
    %13 = vsyncpa %s12, 0
    loop: start=0, step=1, limit=4
    $region2: #{block_forward.1} parent=1 // loop_pre_header
      _
    $region3: #{block_forward.1} parent=1 // loop_header
      %s15 = sphi 0, %s19
      %p16 = scmp.ge.s32.totalorder %s15, 4
      %s25 = sphi 0, %s27
      %s28 = sphi 0, %s25
      %s29 = sphi 0, %s28
      %s45 = sphi 0, %s29
      %s49 = sphi 0, %s49
      %s51 = sphi 0, %s49
      %s52 = sphi 0, %s51
      %s66 = sphi 0, %s52
      %s70 = sphi 0, %s70
      %s72 = sphi 0, %s70
      %s73 = sphi 0, %s72
      %s87 = sphi 0, %s73
      %s91 = sphi 0, %s91
      %s93 = sphi 0, %s91
      %s94 = sphi 0, %s93
      %s108 = sphi 0, %s94
      %s112 = sphi 0, %s112
      %s114 = sphi 0, %s112
      %s115 = sphi 0, %s114
      %s129 = sphi 0, %s115
      %s133 = sphi 0, %s133
      %s135 = sphi 0, %s133
      %s136 = sphi 0, %s135
      %s150 = sphi 0, %s136
      %s156 = sphi 0, %s158
      %s159 = sphi 0, %s156
      %s160 = sphi 0, %s159
      %s176 = sphi 0, %s160
    $region4: #{block_forward.1} parent=1 // loop_header_branch
      %18 = sbr.rel (%p16) target = $region8
    $region5: #{block_forward.1} parent=1 // loop_body
      %s20 = ssub.s32 %s15, 1
      %s21 = ssub.s32 %s15, 2
      %s22 = sadd.s32 %s15, 1
      %s23 = ssub.s32 %s15, %s22
      %p24 = scmp.eq.s32.totalorder %s23, 0
      %s26 = sadd.s32 %s25, 1
      %s27 = scalar_select %p24, %s25, %s26
      %p30 = pneg %p24
      %p31 = scmp.eq.s32.totalorder %s15, 1
      %p32 = por %p30, %p31
      %p33 = scmp.ne.s32.totalorder %s25, %s28
      %p34 = scmp.eq.s32.totalorder %s15, 0
      %p35 = por %p33, %p34
      %p36 = scmp.ne.s32.totalorder %s25, %s28
      %p37 = scmp.eq.s32.totalorder %s20, 1
      %p38 = por %p36, %p37
      %p39 = scmp.ne.s32.totalorder %s28, %s29
      %p40 = scmp.eq.s32.totalorder %s20, 0
      %p41 = por %p39, %p40
      %p42 = scmp.ne.s32.totalorder %s28, %s29
      %p43 = scmp.eq.s32.totalorder %s21, 1
      %p44 = por %p42, %p43
      %p46 = scmp.ne.s32.totalorder %s29, %s45
      %p47 = scmp.eq.s32.totalorder %s21, 0
      %p48 = por %p46, %p47
      %s50 = sadd.s32 %s49, 1
      %p53 = scmp.eq.s32.totalorder %s15, 1
      %p54 = scmp.ne.s32.totalorder %s49, %s51
      %p55 = scmp.eq.s32.totalorder %s15, 0
      %p56 = por %p54, %p55
      %p57 = scmp.ne.s32.totalorder %s49, %s51
      %p58 = scmp.eq.s32.totalorder %s20, 1
      %p59 = por %p57, %p58
      %p60 = scmp.ne.s32.totalorder %s51, %s52
      %p61 = scmp.eq.s32.totalorder %s20, 0
      %p62 = por %p60, %p61
      %p63 = scmp.ne.s32.totalorder %s51, %s52
      %p64 = scmp.eq.s32.totalorder %s21, 1
      %p65 = por %p63, %p64
      %p67 = scmp.ne.s32.totalorder %s52, %s66
      %p68 = scmp.eq.s32.totalorder %s21, 0
      %p69 = por %p67, %p68
      %s71 = sadd.s32 %s70, 1
      %p74 = scmp.eq.s32.totalorder %s15, 1
      %p75 = scmp.ne.s32.totalorder %s70, %s72
      %p76 = scmp.eq.s32.totalorder %s15, 0
      %p77 = por %p75, %p76
      %p78 = scmp.ne.s32.totalorder %s70, %s72
      %p79 = scmp.eq.s32.totalorder %s20, 1
      %p80 = por %p78, %p79
      %p81 = scmp.ne.s32.totalorder %s72, %s73
      %p82 = scmp.eq.s32.totalorder %s20, 0
      %p83 = por %p81, %p82
      %p84 = scmp.ne.s32.totalorder %s72, %s73
      %p85 = scmp.eq.s32.totalorder %s21, 1
      %p86 = por %p84, %p85
      %p88 = scmp.ne.s32.totalorder %s73, %s87
      %p89 = scmp.eq.s32.totalorder %s21, 0
      %p90 = por %p88, %p89
      %s92 = sadd.s32 %s91, 1
      %p95 = scmp.eq.s32.totalorder %s15, 1
      %p96 = scmp.ne.s32.totalorder %s91, %s93
      %p97 = scmp.eq.s32.totalorder %s15, 0
      %p98 = por %p96, %p97
      %p99 = scmp.ne.s32.totalorder %s91, %s93
      %p100 = scmp.eq.s32.totalorder %s20, 1
      %p101 = por %p99, %p100
      %p102 = scmp.ne.s32.totalorder %s93, %s94
      %p103 = scmp.eq.s32.totalorder %s20, 0
      %p104 = por %p102, %p103
      %p105 = scmp.ne.s32.totalorder %s93, %s94
      %p106 = scmp.eq.s32.totalorder %s21, 1
      %p107 = por %p105, %p106
      %p109 = scmp.ne.s32.totalorder %s94, %s108
      %p110 = scmp.eq.s32.totalorder %s21, 0
      %p111 = por %p109, %p110
      %s113 = sadd.s32 %s112, 1
      %p116 = scmp.eq.s32.totalorder %s15, 1
      %p117 = scmp.ne.s32.totalorder %s112, %s114
      %p118 = scmp.eq.s32.totalorder %s15, 0
      %p119 = por %p117, %p118
      %p120 = scmp.ne.s32.totalorder %s112, %s114
      %p121 = scmp.eq.s32.totalorder %s20, 1
      %p122 = por %p120, %p121
      %p123 = scmp.ne.s32.totalorder %s114, %s115
      %p124 = scmp.eq.s32.totalorder %s20, 0
      %p125 = por %p123, %p124
      %p126 = scmp.ne.s32.totalorder %s114, %s115
      %p127 = scmp.eq.s32.totalorder %s21, 1
      %p128 = por %p126, %p127
      %p130 = scmp.ne.s32.totalorder %s115, %s129
      %p131 = scmp.eq.s32.totalorder %s21, 0
      %p132 = por %p130, %p131
      %s134 = sadd.s32 %s133, 1
      %p137 = scmp.eq.s32.totalorder %s15, 1
      %p138 = scmp.ne.s32.totalorder %s133, %s135
      %p139 = scmp.eq.s32.totalorder %s15, 0
      %p140 = por %p138, %p139
      %p141 = scmp.ne.s32.totalorder %s133, %s135
      %p142 = scmp.eq.s32.totalorder %s20, 1
      %p143 = por %p141, %p142
      %p144 = scmp.ne.s32.totalorder %s135, %s136
      %p145 = scmp.eq.s32.totalorder %s20, 0
      %p146 = por %p144, %p145
      %p147 = scmp.ne.s32.totalorder %s135, %s136
      %p148 = scmp.eq.s32.totalorder %s21, 1
      %p149 = por %p147, %p148
      %p151 = scmp.ne.s32.totalorder %s136, %s150
      %p152 = scmp.eq.s32.totalorder %s21, 0
      %p153 = por %p151, %p152
      %s154 = ssub.s32 %s15, %s22
      %p155 = scmp.eq.s32.totalorder %s154, 0
      %s157 = sadd.s32 %s156, 1
      %s158 = scalar_select %p155, %s156, %s157
      %p161 = pneg %p155
      %p162 = scmp.eq.s32.totalorder %s15, 1
      %p163 = por %p161, %p162
      %p164 = scmp.ne.s32.totalorder %s156, %s159
      %p165 = scmp.eq.s32.totalorder %s15, 0
      %p166 = por %p164, %p165
      %p167 = scmp.ne.s32.totalorder %s156, %s159
      %p168 = scmp.eq.s32.totalorder %s20, 1
      %p169 = por %p167, %p168
      %p170 = scmp.ne.s32.totalorder %s159, %s160
      %p171 = scmp.eq.s32.totalorder %s20, 0
      %p172 = por %p170, %p171
      %p173 = scmp.ne.s32.totalorder %s159, %s160
      %p174 = scmp.eq.s32.totalorder %s21, 1
      %p175 = por %p173, %p174
      %p177 = scmp.ne.s32.totalorder %s160, %s176
      %p178 = scmp.eq.s32.totalorder %s21, 0
      %p179 = por %p177, %p178
      %p180 = scmp.le.s32.totalorder 1, %s15
      %p181 = scmp.lt.s32.totalorder %s15, 3
      %p182 = pnand %p180, %p181
      %p183 = pneg %p182
      // Predicated region
      $region9: #{block_forward.1} parent=5 // pred_check
        _
      $region10: #{block_forward.1} parent=5 // pred_check_branch
        %185 = sbr.rel (%p182) target = $region12
      $region11: #{block_forward.1} parent=5 // pred_region
        %s186 = ssub.s32 %s15, 1
        // Predicated region
        $region13: #{block_forward.1} parent=11 // pred_check
          %p187 = pneg %p62
        $region14: #{block_forward.1} parent=11 // pred_check_branch
          %189 = sbr.rel (%p187) target = $region16
        $region15: #{block_forward.1} parent=11 // pred_region
          _
        $region16: #{block_forward.1} parent=11 // pred_fallthru
          _
        // Predicated region
        $region17: #{block_forward.1} parent=11 // pred_check
          %p190 = pneg %p83
        $region18: #{block_forward.1} parent=11 // pred_check_branch
          %192 = sbr.rel (%p190) target = $region20
        $region19: #{block_forward.1} parent=11 // pred_region
          _
        $region20: #{block_forward.1} parent=11 // pred_fallthru
          _
        // Predicated region
        $region21: #{block_forward.1} parent=11 // pred_check
          %p193 = pneg %p104
        $region22: #{block_forward.1} parent=11 // pred_check_branch
          %195 = sbr.rel (%p193) target = $region24
        $region23: #{block_forward.1} parent=11 // pred_region
          _
        $region24: #{block_forward.1} parent=11 // pred_fallthru
          _
        // Predicated region
        $region25: #{block_forward.1} parent=11 // pred_check
          %p196 = pneg %p125
        $region26: #{block_forward.1} parent=11 // pred_check_branch
          %198 = sbr.rel (%p196) target = $region28
        $region27: #{block_forward.1} parent=11 // pred_region
          _
        $region28: #{block_forward.1} parent=11 // pred_fallthru
          _
        // Predicated region
        $region29: #{block_forward.1} parent=11 // pred_check
          %p199 = pneg %p146
        $region30: #{block_forward.1} parent=11 // pred_check_branch
          %201 = sbr.rel (%p199) target = $region32
        $region31: #{block_forward.1} parent=11 // pred_region
          _
        $region32: #{block_forward.1} parent=11 // pred_fallthru
          _
      $region12: #{block_forward.1} parent=5 // pred_fallthru
        _
      %p202 = scmp.lt.s32.totalorder %s15, 2
      // Predicated region
      $region33: #{block_forward.1} parent=5 // pred_check
        %p203 = pneg %p202
      $region34: #{block_forward.1} parent=5 // pred_check_branch
        %205 = sbr.rel (%p203) target = $region36
      $region35: #{block_forward.1} parent=5 // pred_region
        // Predicated region
        $region37: #{block_forward.1} parent=35 // pred_check
          %p206 = pneg %p35
        $region38: #{block_forward.1} parent=35 // pred_check_branch
          %208 = sbr.rel (%p206) target = $region40
        $region39: #{block_forward.1} parent=35 // pred_region
          %p209 = scmp.lt.s32.totalorder %s15, 1
          %s210 = scalar_select %p209, %s15, 1
          %s211 = smul.addr %s210, 8
          %s212 = scalar_lea.vmem %s0, %s211
        $region40: #{block_forward.1} parent=35 // pred_fallthru
          _
      $region36: #{block_forward.1} parent=5 // pred_fallthru
        _
      %p213 = scmp.le.s32.totalorder 1, %s15
      %p214 = scmp.lt.s32.totalorder %s15, 3
      %p215 = pnand %p213, %p214
      %p216 = pneg %p215
      // Predicated region
      $region41: #{block_forward.1} parent=5 // pred_check
        _
      $region42: #{block_forward.1} parent=5 // pred_check_branch
        %218 = sbr.rel (%p215) target = $region44
      $region43: #{block_forward.1} parent=5 // pred_region
        %s219 = ssub.s32 %s15, 1
        %p220 = scmp.lt.s32.totalorder %s20, 1
        %s221 = scalar_select %p220, %s20, 1
        %s222 = smul.addr %s221, 8
        %s223 = scalar_lea.vmem %s0, %s222
        %p224 = pneg %p41
        %p225 = pneg %p38
        %p226 = pneg %p62
        %p227 = pneg %p59
        %p228 = pneg %p83
        %p229 = pneg %p80
        %p230 = pneg %p104
        %p231 = pneg %p101
        %p232 = pneg %p125
        %p233 = pneg %p122
        %p234 = pneg %p146
        %p235 = pneg %p143
        %p236 = pneg %p172
        %p237 = pneg %p169
        %s238 = sand.u32 %s159, 1
        %s239 = scalar_lea.sflag [#allocation3], %s238
        %s240 = sand.u32 %s159, 1
        %s241 = smul.addr %s240, 8
        %s242 = scalar_lea.vmem [#allocation2], %s241
        %p243 = scmp.lt.s32.totalorder %s20, 1
        %s244 = scalar_select %p243, %s20, 1
        %s245 = smul.addr %s244, 8
        %s246 = scalar_lea.vmem %s0, %s245
        %v248 = vld [vmem:[%s246] sm:$0xff]
        %v249 = vld [vmem:[%s1] sm:$0xff]
        %vm250 = vcmask 261120
        %v251 = vsel %vm250, %v248, 0.0
        %252 = vadd.xlane.f32.xlu0 %v251
        %v253 = vpop.xlane.xlu0 %252
        %v254 = vrcp.pop 32.0
        %v255 = vmul.f32 %v253, %v254
        %v256 = vsub.f32 %v248, %v255
        %v257 = vmul.f32 %v256, %v256
        %v258 = vsel %vm250, %v257, 0.0
        %259 = vadd.xlane.f32.xlu0 %v258
        %v260 = vpop.xlane.xlu0 %259
        %v261 = vmul.f32 %v260, %v254
        %v262 = vadd.f32 %v261, 1e-05
        %v263 = vrsqrt.pop %v262
        %v264 = vmul.f32 %v256, %v263
        %v265 = vlaneseq
        %v266 = vshrl.u32 %v265, 7
        %v267 = vsub.s32 0, %v266
        %v268 = vrot.slane %v249, %v267
        %v269 = vmul.f32 %v264, %v268
        %v270 = vlaneseq
        %v271 = vshrl.u32 %v270, 7
        %v272 = vsub.s32 1, %v271
        %v273 = vrot.slane %v249, %v272
        %v274 = vadd.f32 %v269, %v273
        %v275 = vpack.c.bf16 %v274, %v274
        %v276 = vld [vmem:[%s2] sm:$0xf]
        %v277 = vld [vmem:[%s2 + $0x4] sm:$0xf]
        %v278 = vld [vmem:[%s2 + $0x8] sm:$0xf]
        %v279 = vld [vmem:[%s2 + $0xc] sm:$0xf]
        %v280 = vlaneseq
        %v281 = vshrl.u32 %v280, 7
        %v282 = vsub.s32 6, %v281
        %v283 = vrot.slane %v249, %v282
        %v288 = vunpack.c.l.b16 %v276
        %v289 = vunpack.c.l.b16 %v277
        %v290 = vunpack.c.l.b16 %v278
        %v291 = vunpack.c.l.b16 %v279
        %v292 = vpack.c.b16 %v289, %v288
        %v293 = vpack.c.b16 %v291, %v290
        %v297 = vsel %vm250, %v275, 0
        %299 = vmatprep.subr.bf16.mxu0 0
        %300 = vmatpush1.bf16.msra.mxu0 %v292
        %301 = vmatprep.subr.bf16.mxu0 0
        %302 = vmatpush1.bf16.msra.mxu0 %v293
        %303 = vmatprep.subr.bf16.mxu0 0
        %304 = vmatpush1.bf16.msra.mxu0 0
        %305 = vmatprep.subr.bf16.mxu0 0
        %306 = vmatpush1.bf16.msra.mxu0 0
        %307 = vmatprep.subr.bf16.mxu0 0
        %308 = vmatpush1.bf16.msra.mxu0 0
        %309 = vmatprep.subr.bf16.mxu0 0
        %310 = vmatpush1.bf16.msra.mxu0 0
        %311 = vmatprep.subr.bf16.mxu0 0
        %312 = vmatpush1.bf16.msra.mxu0 0
        %313 = vmatprep.subr.bf16.mxu0 0
        %314 = vmatpush1.bf16.msra.mxu0 0
        %315 = vmatprep.subr.bf16.mxu0 0
        %316 = vmatpush1.bf16.msra.mxu0 0
        %317 = vmatprep.subr.bf16.mxu0 0
        %318 = vmatpush1.bf16.msra.mxu0 0
        %319 = vmatprep.subr.bf16.mxu0 0
        %320 = vmatpush1.bf16.msra.mxu0 0
        %321 = vmatprep.subr.bf16.mxu0 0
        %322 = vmatpush1.bf16.msra.mxu0 0
        %323 = vmatprep.subr.bf16.mxu0 0
        %324 = vmatpush1.bf16.msra.mxu0 0
        %325 = vmatprep.subr.bf16.mxu0 0
        %326 = vmatpush1.bf16.msra.mxu0 0
        %327 = vmatprep.subr.bf16.mxu0 0
        %328 = vmatpush1.bf16.msra.mxu0 0
        %329 = vmatprep.subr.bf16.mxu0 0
        %330 = vmatpush1.bf16.msra.mxu0 0
        %331 = vmatprep.mubr.bf16.mxu0 0
        %332 = vmatmul.mubr.bf16.gmra.mrb[0].mxu0 %v297
        %v333 = vpop.f32.mrb[0].mxu0
        %v334 = vadd.f32 %v283, %v333
        %v335 = vpop.f32.mrb[0].mxu0
        %v336 = vpop.f32.mrb[0].mxu0
        %v337 = vpop.f32.mrb[0].mxu0
        %338 = vdwg.mxu0
        %v339 = vlaneseq
        %v340 = vshrl.u32 %v339, 7
        %v341 = vlaneseq
        %v342 = vand.u32 %v341, 127
        %vm343 = vcmp.le.s32.totalorder %v342, %v340
        %v344 = vsel %vm343, 0.0, -1e+30
        %346 = vrot.lane.b32.xlu0 %v334, 96
        %v347 = vpop.permute.xlu0 %346
        %vm348 = vcmask 64512
        %v349 = vsel %vm348, %v334, 0
        %v351 = vsel %vm348, %v347, 0
        %353 = vmatprep.subr.mxu0 0.0
        %354 = vmatpush1.xpose.msra.mxu0 %v351
        %355 = vmatprep.subr.mxu0 0.0
        %356 = vmatpush1.xpose.msra.mxu0 0.0
        %357 = vmatprep.subr.mxu0 0.0
        %358 = vmatpush1.xpose.msra.mxu0 0.0
        %359 = vmatprep.subr.mxu0 0.0
        %360 = vmatpush1.xpose.msra.mxu0 0.0
        %361 = vmatprep.subr.mxu0 0.0
        %362 = vmatpush1.xpose.msra.mxu0 0.0
        %363 = vmatprep.subr.mxu0 0.0
        %364 = vmatpush1.xpose.msra.mxu0 0.0
        %365 = vmatprep.subr.mxu0 0.0
        %366 = vmatpush1.xpose.msra.mxu0 0.0
        %367 = vmatprep.subr.mxu0 0.0
        %368 = vmatpush1.xpose.msra.mxu0 0.0
        %369 = vmatprep.subr.mxu0 0.0
        %370 = vmatpush1.xpose.msra.mxu0 0.0
        %371 = vmatprep.subr.mxu0 0.0
        %372 = vmatpush1.xpose.msra.mxu0 0.0
        %373 = vmatprep.subr.mxu0 0.0
        %374 = vmatpush1.xpose.msra.mxu0 0.0
        %375 = vmatprep.subr.mxu0 0.0
        %376 = vmatpush1.xpose.msra.mxu0 0.0
        %377 = vmatprep.subr.mxu0 0.0
        %378 = vmatpush1.xpose.msra.mxu0 0.0
        %379 = vmatprep.subr.mxu0 0.0
        %380 = vmatpush1.xpose.msra.mxu0 0.0
        %381 = vmatprep.subr.mxu0 0.0
        %382 = vmatpush1.xpose.msra.mxu0 0.0
        %383 = vmatprep.subr.mxu0 0.0
        %384 = vmatpush1.xpose.msra.mxu0 0.0
        %385 = vmatprep.subr.mxu0 0.0
        %386 = vmatpush1.xpose.msra.mxu0 0.0
        %387 = vmatprep.subr.mxu0 0.0
        %388 = vmatpush1.xpose.msra.mxu0 0.0
        %389 = vmatprep.subr.mxu0 0.0
        %390 = vmatpush1.xpose.msra.mxu0 0.0
        %391 = vmatprep.subr.mxu0 0.0
        %392 = vmatpush1.xpose.msra.mxu0 0.0
        %393 = vmatprep.subr.mxu0 0.0
        %394 = vmatpush1.xpose.msra.mxu0 0.0
        %395 = vmatprep.subr.mxu0 0.0
        %396 = vmatpush1.xpose.msra.mxu0 0.0
        %397 = vmatprep.subr.mxu0 0.0
        %398 = vmatpush1.xpose.msra.mxu0 0.0
        %399 = vmatprep.subr.mxu0 0.0
        %400 = vmatpush1.xpose.msra.mxu0 0.0
        %401 = vmatprep.subr.mxu0 0.0
        %402 = vmatpush1.xpose.msra.mxu0 0.0
        %403 = vmatprep.subr.mxu0 0.0
        %404 = vmatpush1.xpose.msra.mxu0 0.0
        %405 = vmatprep.subr.mxu0 0.0
        %406 = vmatpush1.xpose.msra.mxu0 0.0
        %407 = vmatprep.subr.mxu0 0.0
        %408 = vmatpush1.xpose.msra.mxu0 0.0
        %409 = vmatprep.subr.mxu0 0.0
        %410 = vmatpush1.xpose.msra.mxu0 0.0
        %411 = vmatprep.subr.mxu0 0.0
        %412 = vmatpush1.xpose.msra.mxu0 0.0
        %413 = vmatprep.subr.mxu0 0.0
        %414 = vmatpush1.xpose.msra.mxu0 0.0
        %415 = vmatprep.subr.mxu0 0.0
        %416 = vmatpush1.xpose.msra.mxu0 0.0
        %417 = vmatprep.mubr.f32.mxu0 0.0
        %418 = vmatmul.mubr.f32.gmra.mrb[0].mxu0 %v349
        %v419 = vpop.f32.mrb[0].mxu0
        %v420 = vadd.f32 %v344, %v419
        %v421 = vpop.f32.mrb[0].mxu0
        %422 = vdwg.mxu0
        %v423 = vsel %vm348, %v420, -inf
        %424 = vmax.xlane.f32.xlu0 %v423
        %v425 = vpop.xlane.xlu0 %424
        %v426 = vsub.f32 %v420, %v425
        %v427 = vmul.f32 %v426, 1.442695
        %v428 = vpow.pop %v427
        %v429 = vsel %vm348, %v428, 0.0
        %430 = vadd.xlane.f32.xlu0 %v429
        %v431 = vpop.xlane.xlu0 %430
        %v432 = vrcp.pop %v431
        %v433 = vmul.f32 %v428, %v432
        %434 = vrot.lane.b32.xlu0 %v334, 64
        %v435 = vpop.permute.xlu0 %434
        %v438 = vsel %vm348, %v433, 0
        %440 = vmatprep.subr.mxu0 0.0
        %441 = vmatpush1.msra.mxu0 %v435
        %442 = vmatprep.subr.mxu0 0.0
        %443 = vmatpush1.msra.mxu0 0.0
        %444 = vmatprep.subr.mxu0 0.0
        %445 = vmatpush1.msra.mxu0 0.0
        %446 = vmatprep.subr.mxu0 0.0
        %447 = vmatpush1.msra.mxu0 0.0
        %448 = vmatprep.subr.mxu0 0.0
        %449 = vmatpush1.msra.mxu0 0.0
        %450 = vmatprep.subr.mxu0 0.0
        %451 = vmatpush1.msra.mxu0 0.0
        %452 = vmatprep.subr.mxu0 0.0
        %453 = vmatpush1.msra.mxu0 0.0
        %454 = vmatprep.subr.mxu0 0.0
        %455 = vmatpush1.msra.mxu0 0.0
        %456 = vmatprep.subr.mxu0 0.0
        %457 = vmatpush1.msra.mxu0 0.0
        %458 = vmatprep.subr.mxu0 0.0
        %459 = vmatpush1.msra.mxu0 0.0
        %460 = vmatprep.subr.mxu0 0.0
        %461 = vmatpush1.msra.mxu0 0.0
        %462 = vmatprep.subr.mxu0 0.0
        %463 = vmatpush1.msra.mxu0 0.0
        %464 = vmatprep.subr.mxu0 0.0
        %465 = vmatpush1.msra.mxu0 0.0
        %466 = vmatprep.subr.mxu0 0.0
        %467 = vmatpush1.msra.mxu0 0.0
        %468 = vmatprep.subr.mxu0 0.0
        %469 = vmatpush1.msra.mxu0 0.0
        %470 = vmatprep.subr.mxu0 0.0
        %471 = vmatpush1.msra.mxu0 0.0
        %472 = vmatprep.subr.mxu0 0.0
        %473 = vmatpush1.msra.mxu0 0.0
        %474 = vmatprep.subr.mxu0 0.0
        %475 = vmatpush1.msra.mxu0 0.0
        %476 = vmatprep.subr.mxu0 0.0
        %477 = vmatpush1.msra.mxu0 0.0
        %478 = vmatprep.subr.mxu0 0.0
        %479 = vmatpush1.msra.mxu0 0.0
        %480 = vmatprep.subr.mxu0 0.0
        %481 = vmatpush1.msra.mxu0 0.0
        %482 = vmatprep.subr.mxu0 0.0
        %483 = vmatpush1.msra.mxu0 0.0
        %484 = vmatprep.subr.mxu0 0.0
        %485 = vmatpush1.msra.mxu0 0.0
        %486 = vmatprep.subr.mxu0 0.0
        %487 = vmatpush1.msra.mxu0 0.0
        %488 = vmatprep.subr.mxu0 0.0
        %489 = vmatpush1.msra.mxu0 0.0
        %490 = vmatprep.subr.mxu0 0.0
        %491 = vmatpush1.msra.mxu0 0.0
        %492 = vmatprep.subr.mxu0 0.0
        %493 = vmatpush1.msra.mxu0 0.0
        %494 = vmatprep.subr.mxu0 0.0
        %495 = vmatpush1.msra.mxu0 0.0
        %496 = vmatprep.subr.mxu0 0.0
        %497 = vmatpush1.msra.mxu0 0.0
        %498 = vmatprep.subr.mxu0 0.0
        %499 = vmatpush1.msra.mxu0 0.0
        %500 = vmatprep.subr.mxu0 0.0
        %501 = vmatpush1.msra.mxu0 0.0
        %502 = vmatprep.subr.mxu0 0.0
        %503 = vmatpush1.msra.mxu0 0.0
        %504 = vmatprep.mubr.f32.mxu0 0.0
        %505 = vmatmul.mubr.f32.gmra.mrb[0].mxu0 %v438
        %v506 = vpop.f32.mrb[0].mxu0
        %v507 = vadd.f32 0.0, %v506
        %v508 = vpop.f32.mrb[0].mxu0
        %509 = vdwg.mxu0
        %510 = vrot.lane.b32.xlu0 %v334, 120
        %v511 = vpop.permute.xlu0 %510
        %512 = vrot.lane.b32.xlu0 %v334, 88
        %v513 = vpop.permute.xlu0 %512
        %v514 = vsel %vm348, %v511, 0
        %v516 = vsel %vm348, %v513, 0
        %518 = vmatprep.subr.mxu0 0.0
        %519 = vmatpush1.xpose.msra.mxu0 %v516
        %520 = vmatprep.subr.mxu0 0.0
        %521 = vmatpush1.xpose.msra.mxu0 0.0
        %522 = vmatprep.subr.mxu0 0.0
        %523 = vmatpush1.xpose.msra.mxu0 0.0
        %524 = vmatprep.subr.mxu0 0.0
        %525 = vmatpush1.xpose.msra.mxu0 0.0
        %526 = vmatprep.subr.mxu0 0.0
        %527 = vmatpush1.xpose.msra.mxu0 0.0
        %528 = vmatprep.subr.mxu0 0.0
        %529 = vmatpush1.xpose.msra.mxu0 0.0
        %530 = vmatprep.subr.mxu0 0.0
        %531 = vmatpush1.xpose.msra.mxu0 0.0
        %532 = vmatprep.subr.mxu0 0.0
        %533 = vmatpush1.xpose.msra.mxu0 0.0
        %534 = vmatprep.subr.mxu0 0.0
        %535 = vmatpush1.xpose.msra.mxu0 0.0
        %536 = vmatprep.subr.mxu0 0.0
        %537 = vmatpush1.xpose.msra.mxu0 0.0
        %538 = vmatprep.subr.mxu0 0.0
        %539 = vmatpush1.xpose.msra.mxu0 0.0
        %540 = vmatprep.subr.mxu0 0.0
        %541 = vmatpush1.xpose.msra.mxu0 0.0
        %542 = vmatprep.subr.mxu0 0.0
        %543 = vmatpush1.xpose.msra.mxu0 0.0
        %544 = vmatprep.subr.mxu0 0.0
        %545 = vmatpush1.xpose.msra.mxu0 0.0
        %546 = vmatprep.subr.mxu0 0.0
        %547 = vmatpush1.xpose.msra.mxu0 0.0
        %548 = vmatprep.subr.mxu0 0.0
        %549 = vmatpush1.xpose.msra.mxu0 0.0
        %550 = vmatprep.subr.mxu0 0.0
        %551 = vmatpush1.xpose.msra.mxu0 0.0
        %552 = vmatprep.subr.mxu0 0.0
        %553 = vmatpush1.xpose.msra.mxu0 0.0
        %554 = vmatprep.subr.mxu0 0.0
        %555 = vmatpush1.xpose.msra.mxu0 0.0
        %556 = vmatprep.subr.mxu0 0.0
        %557 = vmatpush1.xpose.msra.mxu0 0.0
        %558 = vmatprep.subr.mxu0 0.0
        %559 = vmatpush1.xpose.msra.mxu0 0.0
        %560 = vmatprep.subr.mxu0 0.0
        %561 = vmatpush1.xpose.msra.mxu0 0.0
        %562 = vmatprep.subr.mxu0 0.0
        %563 = vmatpush1.xpose.msra.mxu0 0.0
        %564 = vmatprep.subr.mxu0 0.0
        %565 = vmatpush1.xpose.msra.mxu0 0.0
        %566 = vmatprep.subr.mxu0 0.0
        %567 = vmatpush1.xpose.msra.mxu0 0.0
        %568 = vmatprep.subr.mxu0 0.0
        %569 = vmatpush1.xpose.msra.mxu0 0.0
        %570 = vmatprep.subr.mxu0 0.0
        %571 = vmatpush1.xpose.msra.mxu0 0.0
        %572 = vmatprep.subr.mxu0 0.0
        %573 = vmatpush1.xpose.msra.mxu0 0.0
        %574 = vmatprep.subr.mxu0 0.0
        %575 = vmatpush1.xpose.msra.mxu0 0.0
        %576 = vmatprep.subr.mxu0 0.0
        %577 = vmatpush1.xpose.msra.mxu0 0.0
        %578 = vmatprep.subr.mxu0 0.0
        %579 = vmatpush1.xpose.msra.mxu0 0.0
        %580 = vmatprep.subr.mxu0 0.0
        %581 = vmatpush1.xpose.msra.mxu0 0.0
        %582 = vmatprep.mubr.f32.mxu0 0.0
        %583 = vmatmul.mubr.f32.gmra.mrb[0].mxu0 %v514
        %v584 = vpop.f32.mrb[0].mxu0
        %v585 = vadd.f32 %v344, %v584
        %v586 = vpop.f32.mrb[0].mxu0
        %587 = vdwg.mxu0
        %v588 = vsel %vm348, %v585, -inf
        %589 = vmax.xlane.f32.xlu0 %v588
        %v590 = vpop.xlane.xlu0 %589
        %v591 = vsub.f32 %v585, %v590
        %v592 = vmul.f32 %v591, 1.442695
        %v593 = vpow.pop %v592
        %v594 = vsel %vm348, %v593, 0.0
        %595 = vadd.xlane.f32.xlu0 %v594
        %v596 = vpop.xlane.xlu0 %595
        %v597 = vrcp.pop %v596
        %v598 = vmul.f32 %v593, %v597
        %599 = vrot.lane.b32.xlu0 %v334, 56
        %v600 = vpop.permute.xlu0 %599
        %v603 = vsel %vm348, %v598, 0
        %605 = vmatprep.subr.mxu0 0.0
        %606 = vmatpush1.msra.mxu0 %v600
        %607 = vmatprep.subr.mxu0 0.0
        %608 = vmatpush1.msra.mxu0 0.0
        %609 = vmatprep.subr.mxu0 0.0
        %610 = vmatpush1.msra.mxu0 0.0
        %611 = vmatprep.subr.mxu0 0.0
        %612 = vmatpush1.msra.mxu0 0.0
        %613 = vmatprep.subr.mxu0 0.0
        %614 = vmatpush1.msra.mxu0 0.0
        %615 = vmatprep.subr.mxu0 0.0
        %616 = vmatpush1.msra.mxu0 0.0
        %617 = vmatprep.subr.mxu0 0.0
        %618 = vmatpush1.msra.mxu0 0.0
        %619 = vmatprep.subr.mxu0 0.0
        %620 = vmatpush1.msra.mxu0 0.0
        %621 = vmatprep.subr.mxu0 0.0
        %622 = vmatpush1.msra.mxu0 0.0
        %623 = vmatprep.subr.mxu0 0.0
        %624 = vmatpush1.msra.mxu0 0.0
        %625 = vmatprep.subr.mxu0 0.0
        %626 = vmatpush1.msra.mxu0 0.0
        %627 = vmatprep.subr.mxu0 0.0
        %628 = vmatpush1.msra.mxu0 0.0
        %629 = vmatprep.subr.mxu0 0.0
        %630 = vmatpush1.msra.mxu0 0.0
        %631 = vmatprep.subr.mxu0 0.0
        %632 = vmatpush1.msra.mxu0 0.0
        %633 = vmatprep.subr.mxu0 0.0
        %634 = vmatpush1.msra.mxu0 0.0
        %635 = vmatprep.subr.mxu0 0.0
        %636 = vmatpush1.msra.mxu0 0.0
        %637 = vmatprep.subr.mxu0 0.0
        %638 = vmatpush1.msra.mxu0 0.0
        %639 = vmatprep.subr.mxu0 0.0
        %640 = vmatpush1.msra.mxu0 0.0
        %641 = vmatprep.subr.mxu0 0.0
        %642 = vmatpush1.msra.mxu0 0.0
        %643 = vmatprep.subr.mxu0 0.0
        %644 = vmatpush1.msra.mxu0 0.0
        %645 = vmatprep.subr.mxu0 0.0
        %646 = vmatpush1.msra.mxu0 0.0
        %647 = vmatprep.subr.mxu0 0.0
        %648 = vmatpush1.msra.mxu0 0.0
        %649 = vmatprep.subr.mxu0 0.0
        %650 = vmatpush1.msra.mxu0 0.0
        %651 = vmatprep.subr.mxu0 0.0
        %652 = vmatpush1.msra.mxu0 0.0
        %653 = vmatprep.subr.mxu0 0.0
        %654 = vmatpush1.msra.mxu0 0.0
        %655 = vmatprep.subr.mxu0 0.0
        %656 = vmatpush1.msra.mxu0 0.0
        %657 = vmatprep.subr.mxu0 0.0
        %658 = vmatpush1.msra.mxu0 0.0
        %659 = vmatprep.subr.mxu0 0.0
        %660 = vmatpush1.msra.mxu0 0.0
        %661 = vmatprep.subr.mxu0 0.0
        %662 = vmatpush1.msra.mxu0 0.0
        %663 = vmatprep.subr.mxu0 0.0
        %664 = vmatpush1.msra.mxu0 0.0
        %665 = vmatprep.subr.mxu0 0.0
        %666 = vmatpush1.msra.mxu0 0.0
        %667 = vmatprep.subr.mxu0 0.0
        %668 = vmatpush1.msra.mxu0 0.0
        %669 = vmatprep.mubr.f32.mxu0 0.0
        %670 = vmatmul.mubr.f32.gmra.mrb[0].mxu0 %v603
        %v671 = vpop.f32.mrb[0].mxu0
        %v672 = vadd.f32 0.0, %v671
        %v673 = vpop.f32.mrb[0].mxu0
        %674 = vdwg.mxu0
        %675 = vrot.lane.b32.xlu0 %v334, 112
        %v676 = vpop.permute.xlu0 %675
        %677 = vrot.lane.b32.xlu0 %v334, 80
        %v678 = vpop.permute.xlu0 %677
        %v679 = vsel %vm348, %v676, 0
        %v681 = vsel %vm348, %v678, 0
        %683 = vmatprep.subr.mxu0 0.0
        %684 = vmatpush1.xpose.msra.mxu0 %v681
        %685 = vmatprep.subr.mxu0 0.0
        %686 = vmatpush1.xpose.msra.mxu0 0.0
        %687 = vmatprep.subr.mxu0 0.0
        %688 = vmatpush1.xpose.msra.mxu0 0.0
        %689 = vmatprep.subr.mxu0 0.0
        %690 = vmatpush1.xpose.msra.mxu0 0.0
        %691 = vmatprep.subr.mxu0 0.0
        %692 = vmatpush1.xpose.msra.mxu0 0.0
        %693 = vmatprep.subr.mxu0 0.0
        %694 = vmatpush1.xpose.msra.mxu0 0.0
        %695 = vmatprep.subr.mxu0 0.0
        %696 = vmatpush1.xpose.msra.mxu0 0.0
        %697 = vmatprep.subr.mxu0 0.0
        %698 = vmatpush1.xpose.msra.mxu0 0.0
        %699 = vmatprep.subr.mxu0 0.0
        %700 = vmatpush1.xpose.msra.mxu0 0.0
        %701 = vmatprep.subr.mxu0 0.0
        %702 = vmatpush1.xpose.msra.mxu0 0.0
        %703 = vmatprep.subr.mxu0 0.0
        %704 = vmatpush1.xpose.msra.mxu0 0.0
        %705 = vmatprep.subr.mxu0 0.0
        %706 = vmatpush1.xpose.msra.mxu0 0.0
        %707 = vmatprep.subr.mxu0 0.0
        %708 = vmatpush1.xpose.msra.mxu0 0.0
        %709 = vmatprep.subr.mxu0 0.0
        %710 = vmatpush1.xpose.msra.mxu0 0.0
        %711 = vmatprep.subr.mxu0 0.0
        %712 = vmatpush1.xpose.msra.mxu0 0.0
        %713 = vmatprep.subr.mxu0 0.0
        %714 = vmatpush1.xpose.msra.mxu0 0.0
        %715 = vmatprep.subr.mxu0 0.0
        %716 = vmatpush1.xpose.msra.mxu0 0.0
        %717 = vmatprep.subr.mxu0 0.0
        %718 = vmatpush1.xpose.msra.mxu0 0.0
        %719 = vmatprep.subr.mxu0 0.0
        %720 = vmatpush1.xpose.msra.mxu0 0.0
        %721 = vmatprep.subr.mxu0 0.0
        %722 = vmatpush1.xpose.msra.mxu0 0.0
        %723 = vmatprep.subr.mxu0 0.0
        %724 = vmatpush1.xpose.msra.mxu0 0.0
        %725 = vmatprep.subr.mxu0 0.0
        %726 = vmatpush1.xpose.msra.mxu0 0.0
        %727 = vmatprep.subr.mxu0 0.0
        %728 = vmatpush1.xpose.msra.mxu0 0.0
        %729 = vmatprep.subr.mxu0 0.0
        %730 = vmatpush1.xpose.msra.mxu0 0.0
        %731 = vmatprep.subr.mxu0 0.0
        %732 = vmatpush1.xpose.msra.mxu0 0.0
        %733 = vmatprep.subr.mxu0 0.0
        %734 = vmatpush1.xpose.msra.mxu0 0.0
        %735 = vmatprep.subr.mxu0 0.0
        %736 = vmatpush1.xpose.msra.mxu0 0.0
        %737 = vmatprep.subr.mxu0 0.0
        %738 = vmatpush1.xpose.msra.mxu0 0.0
        %739 = vmatprep.subr.mxu0 0.0
        %740 = vmatpush1.xpose.msra.mxu0 0.0
        %741 = vmatprep.subr.mxu0 0.0
        %742 = vmatpush1.xpose.msra.mxu0 0.0
        %743 = vmatprep.subr.mxu0 0.0
        %744 = vmatpush1.xpose.msra.mxu0 0.0
        %745 = vmatprep.subr.mxu0 0.0
        %746 = vmatpush1.xpose.msra.mxu0 0.0
        %747 = vmatprep.mubr.f32.mxu0 0.0
        %748 = vmatmul.mubr.f32.gmra.mrb[0].mxu0 %v679
        %v749 = vpop.f32.mrb[0].mxu0
        %v750 = vadd.f32 %v344, %v749
        %v751 = vpop.f32.mrb[0].mxu0
        %752 = vdwg.mxu0
        %v753 = vsel %vm348, %v750, -inf
        %754 = vmax.xlane.f32.xlu0 %v753
        %v755 = vpop.xlane.xlu0 %754
        %v756 = vsub.f32 %v750, %v755
        %v757 = vmul.f32 %v756, 1.442695
        %v758 = vpow.pop %v757
        %v759 = vsel %vm348, %v758, 0.0
        %760 = vadd.xlane.f32.xlu0 %v759
        %v761 = vpop.xlane.xlu0 %760
        %v762 = vrcp.pop %v761
        %v763 = vmul.f32 %v758, %v762
        %764 = vrot.lane.b32.xlu0 %v334, 48
        %v765 = vpop.permute.xlu0 %764
        %v768 = vsel %vm348, %v763, 0
        %770 = vmatprep.subr.mxu0 0.0
        %771 = vmatpush1.msra.mxu0 %v765
        %772 = vmatprep.subr.mxu0 0.0
        %773 = vmatpush1.msra.mxu0 0.0
        %774 = vmatprep.subr.mxu0 0.0
        %775 = vmatpush1.msra.mxu0 0.0
        %776 = vmatprep.subr.mxu0 0.0
        %777 = vmatpush1.msra.mxu0 0.0
        %778 = vmatprep.subr.mxu0 0.0
        %779 = vmatpush1.msra.mxu0 0.0
        %780 = vmatprep.subr.mxu0 0.0
        %781 = vmatpush1.msra.mxu0 0.0
        %782 = vmatprep.subr.mxu0 0.0
        %783 = vmatpush1.msra.mxu0 0.0
        %784 = vmatprep.subr.mxu0 0.0
        %785 = vmatpush1.msra.mxu0 0.0
        %786 = vmatprep.subr.mxu0 0.0
        %787 = vmatpush1.msra.mxu0 0.0
        %788 = vmatprep.subr.mxu0 0.0
        %789 = vmatpush1.msra.mxu0 0.0
        %790 = vmatprep.subr.mxu0 0.0
        %791 = vmatpush1.msra.mxu0 0.0
        %792 = vmatprep.subr.mxu0 0.0
        %793 = vmatpush1.msra.mxu0 0.0
        %794 = vmatprep.subr.mxu0 0.0
        %795 = vmatpush1.msra.mxu0 0.0
        %796 = vmatprep.subr.mxu0 0.0
        %797 = vmatpush1.msra.mxu0 0.0
        %798 = vmatprep.subr.mxu0 0.0
        %799 = vmatpush1.msra.mxu0 0.0
        %800 = vmatprep.subr.mxu0 0.0
        %801 = vmatpush1.msra.mxu0 0.0
        %802 = vmatprep.subr.mxu0 0.0
        %803 = vmatpush1.msra.mxu0 0.0
        %804 = vmatprep.subr.mxu0 0.0
        %805 = vmatpush1.msra.mxu0 0.0
        %806 = vmatprep.subr.mxu0 0.0
        %807 = vmatpush1.msra.mxu0 0.0
        %808 = vmatprep.subr.mxu0 0.0
        %809 = vmatpush1.msra.mxu0 0.0
        %810 = vmatprep.subr.mxu0 0.0
        %811 = vmatpush1.msra.mxu0 0.0
        %812 = vmatprep.subr.mxu0 0.0
        %813 = vmatpush1.msra.mxu0 0.0
        %814 = vmatprep.subr.mxu0 0.0
        %815 = vmatpush1.msra.mxu0 0.0
        %816 = vmatprep.subr.mxu0 0.0
        %817 = vmatpush1.msra.mxu0 0.0
        %818 = vmatprep.subr.mxu0 0.0
        %819 = vmatpush1.msra.mxu0 0.0
        %820 = vmatprep.subr.mxu0 0.0
        %821 = vmatpush1.msra.mxu0 0.0
        %822 = vmatprep.subr.mxu0 0.0
        %823 = vmatpush1.msra.mxu0 0.0
        %824 = vmatprep.subr.mxu0 0.0
        %825 = vmatpush1.msra.mxu0 0.0
        %826 = vmatprep.subr.mxu0 0.0
        %827 = vmatpush1.msra.mxu0 0.0
        %828 = vmatprep.subr.mxu0 0.0
        %829 = vmatpush1.msra.mxu0 0.0
        %830 = vmatprep.subr.mxu0 0.0
        %831 = vmatpush1.msra.mxu0 0.0
        %832 = vmatprep.subr.mxu0 0.0
        %833 = vmatpush1.msra.mxu0 0.0
        %834 = vmatprep.mubr.f32.mxu0 0.0
        %835 = vmatmul.mubr.f32.gmra.mrb[0].mxu0 %v768
        %v836 = vpop.f32.mrb[0].mxu0
        %v837 = vadd.f32 0.0, %v836
        %v838 = vpop.f32.mrb[0].mxu0
        %839 = vdwg.mxu0
        %840 = vrot.lane.b32.xlu0 %v334, 104
        %v841 = vpop.permute.xlu0 %840
        %842 = vrot.lane.b32.xlu0 %v334, 72
        %v843 = vpop.permute.xlu0 %842
        %v844 = vsel %vm348, %v841, 0
        %v846 = vsel %vm348, %v843, 0
        %848 = vmatprep.subr.mxu0 0.0
        %849 = vmatpush1.xpose.msra.mxu0 %v846
        %850 = vmatprep.subr.mxu0 0.0
        %851 = vmatpush1.xpose.msra.mxu0 0.0
        %852 = vmatprep.subr.mxu0 0.0
        %853 = vmatpush1.xpose.msra.mxu0 0.0
        %854 = vmatprep.subr.mxu0 0.0
        %855 = vmatpush1.xpose.msra.mxu0 0.0
        %856 = vmatprep.subr.mxu0 0.0
        %857 = vmatpush1.xpose.msra.mxu0 0.0
        %858 = vmatprep.subr.mxu0 0.0
        %859 = vmatpush1.xpose.msra.mxu0 0.0
        %860 = vmatprep.subr.mxu0 0.0
        %861 = vmatpush1.xpose.msra.mxu0 0.0
        %862 = vmatprep.subr.mxu0 0.0
        %863 = vmatpush1.xpose.msra.mxu0 0.0
        %864 = vmatprep.subr.mxu0 0.0
        %865 = vmatpush1.xpose.msra.mxu0 0.0
        %866 = vmatprep.subr.mxu0 0.0
        %867 = vmatpush1.xpose.msra.mxu0 0.0
        %868 = vmatprep.subr.mxu0 0.0
        %869 = vmatpush1.xpose.msra.mxu0 0.0
        %870 = vmatprep.subr.mxu0 0.0
        %871 = vmatpush1.xpose.msra.mxu0 0.0
        %872 = vmatprep.subr.mxu0 0.0
        %873 = vmatpush1.xpose.msra.mxu0 0.0
        %874 = vmatprep.subr.mxu0 0.0
        %875 = vmatpush1.xpose.msra.mxu0 0.0
        %876 = vmatprep.subr.mxu0 0.0
        %877 = vmatpush1.xpose.msra.mxu0 0.0
        %878 = vmatprep.subr.mxu0 0.0
        %879 = vmatpush1.xpose.msra.mxu0 0.0
        %880 = vmatprep.subr.mxu0 0.0
        %881 = vmatpush1.xpose.msra.mxu0 0.0
        %882 = vmatprep.subr.mxu0 0.0
        %883 = vmatpush1.xpose.msra.mxu0 0.0
        %884 = vmatprep.subr.mxu0 0.0
        %885 = vmatpush1.xpose.msra.mxu0 0.0
        %886 = vmatprep.subr.mxu0 0.0
        %887 = vmatpush1.xpose.msra.mxu0 0.0
        %888 = vmatprep.subr.mxu0 0.0
        %889 = vmatpush1.xpose.msra.mxu0 0.0
        %890 = vmatprep.subr.mxu0 0.0
        %891 = vmatpush1.xpose.msra.mxu0 0.0
        %892 = vmatprep.subr.mxu0 0.0
        %893 = vmatpush1.xpose.msra.mxu0 0.0
        %894 = vmatprep.subr.mxu0 0.0
        %895 = vmatpush1.xpose.msra.mxu0 0.0
        %896 = vmatprep.subr.mxu0 0.0
        %897 = vmatpush1.xpose.msra.mxu0 0.0
        %898 = vmatprep.subr.mxu0 0.0
        %899 = vmatpush1.xpose.msra.mxu0 0.0
        %900 = vmatprep.subr.mxu0 0.0
        %901 = vmatpush1.xpose.msra.mxu0 0.0
        %902 = vmatprep.subr.mxu0 0.0
        %903 = vmatpush1.xpose.msra.mxu0 0.0
        %904 = vmatprep.subr.mxu0 0.0
        %905 = vmatpush1.xpose.msra.mxu0 0.0
        %906 = vmatprep.subr.mxu0 0.0
        %907 = vmatpush1.xpose.msra.mxu0 0.0
        %908 = vmatprep.subr.mxu0 0.0
        %909 = vmatpush1.xpose.msra.mxu0 0.0
        %910 = vmatprep.subr.mxu0 0.0
        %911 = vmatpush1.xpose.msra.mxu0 0.0
        %912 = vmatprep.mubr.f32.mxu0 0.0
        %913 = vmatmul.mubr.f32.gmra.mrb[0].mxu0 %v844
        %v914 = vpop.f32.mrb[0].mxu0
        %v915 = vadd.f32 %v344, %v914
        %v916 = vpop.f32.mrb[0].mxu0
        %917 = vdwg.mxu0
        %v918 = vsel %vm348, %v915, -inf
        %919 = vmax.xlane.f32.xlu0 %v918
        %v920 = vpop.xlane.xlu0 %919
        %v921 = vsub.f32 %v915, %v920
        %v922 = vmul.f32 %v921, 1.442695
        %v923 = vpow.pop %v922
        %v924 = vsel %vm348, %v923, 0.0
        %925 = vadd.xlane.f32.xlu0 %v924
        %v926 = vpop.xlane.xlu0 %925
        %v927 = vrcp.pop %v926
        %v928 = vmul.f32 %v923, %v927
        %929 = vrot.lane.b32.xlu0 %v334, 40
        %v930 = vpop.permute.xlu0 %929
        %v933 = vsel %vm348, %v928, 0
        %935 = vmatprep.subr.mxu0 0.0
        %936 = vmatpush1.msra.mxu0 %v930
        %937 = vmatprep.subr.mxu0 0.0
        %938 = vmatpush1.msra.mxu0 0.0
        %939 = vmatprep.subr.mxu0 0.0
        %940 = vmatpush1.msra.mxu0 0.0
        %941 = vmatprep.subr.mxu0 0.0
        %942 = vmatpush1.msra.mxu0 0.0
        %943 = vmatprep.subr.mxu0 0.0
        %944 = vmatpush1.msra.mxu0 0.0
        %945 = vmatprep.subr.mxu0 0.0
        %946 = vmatpush1.msra.mxu0 0.0
        %947 = vmatprep.subr.mxu0 0.0
        %948 = vmatpush1.msra.mxu0 0.0
        %949 = vmatprep.subr.mxu0 0.0
        %950 = vmatpush1.msra.mxu0 0.0
        %951 = vmatprep.subr.mxu0 0.0
        %952 = vmatpush1.msra.mxu0 0.0
        %953 = vmatprep.subr.mxu0 0.0
        %954 = vmatpush1.msra.mxu0 0.0
        %955 = vmatprep.subr.mxu0 0.0
        %956 = vmatpush1.msra.mxu0 0.0
        %957 = vmatprep.subr.mxu0 0.0
        %958 = vmatpush1.msra.mxu0 0.0
        %959 = vmatprep.subr.mxu0 0.0
        %960 = vmatpush1.msra.mxu0 0.0
        %961 = vmatprep.subr.mxu0 0.0
        %962 = vmatpush1.msra.mxu0 0.0
        %963 = vmatprep.subr.mxu0 0.0
        %964 = vmatpush1.msra.mxu0 0.0
        %965 = vmatprep.subr.mxu0 0.0
        %966 = vmatpush1.msra.mxu0 0.0
        %967 = vmatprep.subr.mxu0 0.0
        %968 = vmatpush1.msra.mxu0 0.0
        %969 = vmatprep.subr.mxu0 0.0
        %970 = vmatpush1.msra.mxu0 0.0
        %971 = vmatprep.subr.mxu0 0.0
        %972 = vmatpush1.msra.mxu0 0.0
        %973 = vmatprep.subr.mxu0 0.0
        %974 = vmatpush1.msra.mxu0 0.0
        %975 = vmatprep.subr.mxu0 0.0
        %976 = vmatpush1.msra.mxu0 0.0
        %977 = vmatprep.subr.mxu0 0.0
        %978 = vmatpush1.msra.mxu0 0.0
        %979 = vmatprep.subr.mxu0 0.0
        %980 = vmatpush1.msra.mxu0 0.0
        %981 = vmatprep.subr.mxu0 0.0
        %982 = vmatpush1.msra.mxu0 0.0
        %983 = vmatprep.subr.mxu0 0.0
        %984 = vmatpush1.msra.mxu0 0.0
        %985 = vmatprep.subr.mxu0 0.0
        %986 = vmatpush1.msra.mxu0 0.0
        %987 = vmatprep.subr.mxu0 0.0
        %988 = vmatpush1.msra.mxu0 0.0
        %989 = vmatprep.subr.mxu0 0.0
        %990 = vmatpush1.msra.mxu0 0.0
        %991 = vmatprep.subr.mxu0 0.0
        %992 = vmatpush1.msra.mxu0 0.0
        %993 = vmatprep.subr.mxu0 0.0
        %994 = vmatpush1.msra.mxu0 0.0
        %995 = vmatprep.subr.mxu0 0.0
        %996 = vmatpush1.msra.mxu0 0.0
        %997 = vmatprep.subr.mxu0 0.0
        %998 = vmatpush1.msra.mxu0 0.0
        %999 = vmatprep.mubr.f32.mxu0 0.0
        %1000 = vmatmul.mubr.f32.gmra.mrb[0].mxu0 %v933
        %v1001 = vpop.f32.mrb[0].mxu0
        %v1002 = vadd.f32 0.0, %v1001
        %v1003 = vpop.f32.mrb[0].mxu0
        %1004 = vdwg.mxu0
        %1006 = vrot.lane.b32.xlu0 %v672, 8
        %v1007 = vpop.permute.xlu0 %1006
        %1010 = vrot.lane.b32.xlu0 %v837, 16
        %v1011 = vpop.permute.xlu0 %1010
        %1014 = vrot.lane.b32.xlu0 %v1002, 24
        %v1015 = vpop.permute.xlu0 %1014
        %v1017 = vsel %vm348, %v507, %v1007
        %vm1018 = vcmask 130048
        %v1019 = vsel %vm1018, %v1017, %v1011
        %vm1020 = vcmask 195584
        %v1021 = vsel %vm1020, %v1019, %v1015
        %v1022 = vpack.c.bf16 %v1021, %v1021
        %v1023 = vld [vmem:[%s3] sm:$0xf]
        %v1024 = vld [vmem:[%s3 + $0x4] sm:$0xf]
        %v1025 = vld [vmem:[%s3 + $0x8] sm:$0xf]
        %v1026 = vld [vmem:[%s3 + $0xc] sm:$0xf]
        %v1027 = vlaneseq
        %v1028 = vshrl.u32 %v1027, 7
        %v1029 = vsub.s32 4, %v1028
        %v1030 = vrot.slane %v249, %v1029
        %v1035 = vunpack.c.l.b16 %v1023
        %v1036 = vunpack.c.l.b16 %v1024
        %v1037 = vunpack.c.l.b16 %v1025
        %v1038 = vunpack.c.l.b16 %v1026
        %v1039 = vpack.c.b16 %v1036, %v1035
        %v1040 = vpack.c.b16 %v1038, %v1037
        %v1044 = vsel %vm250, %v1022, 0
        %1046 = vmatprep.subr.bf16.mxu0 0
        %1047 = vmatpush1.bf16.msra.mxu0 %v1039
        %1048 = vmatprep.subr.bf16.mxu0 0
        %1049 = vmatpush1.bf16.msra.mxu0 %v1040
        %1050 = vmatprep.subr.bf16.mxu0 0
        %1051 = vmatpush1.bf16.msra.mxu0 0
        %1052 = vmatprep.subr.bf16.mxu0 0
        %1053 = vmatpush1.bf16.msra.mxu0 0
        %1054 = vmatprep.subr.bf16.mxu0 0
        %1055 = vmatpush1.bf16.msra.mxu0 0
        %1056 = vmatprep.subr.bf16.mxu0 0
        %1057 = vmatpush1.bf16.msra.mxu0 0
        %1058 = vmatprep.subr.bf16.mxu0 0
        %1059 = vmatpush1.bf16.msra.mxu0 0
        %1060 = vmatprep.subr.bf16.mxu0 0
        %1061 = vmatpush1.bf16.msra.mxu0 0
        %1062 = vmatprep.subr.bf16.mxu0 0
        %1063 = vmatpush1.bf16.msra.mxu0 0
        %1064 = vmatprep.subr.bf16.mxu0 0
        %1065 = vmatpush1.bf16.msra.mxu0 0
        %1066 = vmatprep.subr.bf16.mxu0 0
        %1067 = vmatpush1.bf16.msra.mxu0 0
        %1068 = vmatprep.subr.bf16.mxu0 0
        %1069 = vmatpush1.bf16.msra.mxu0 0
        %1070 = vmatprep.subr.bf16.mxu0 0
        %1071 = vmatpush1.bf16.msra.mxu0 0
        %1072 = vmatprep.subr.bf16.mxu0 0
        %1073 = vmatpush1.bf16.msra.mxu0 0
        %1074 = vmatprep.subr.bf16.mxu0 0
        %1075 = vmatpush1.bf16.msra.mxu0 0
        %1076 = vmatprep.subr.bf16.mxu0 0
        %1077 = vmatpush1.bf16.msra.mxu0 0
        %1078 = vmatprep.mubr.bf16.mxu0 0
        %1079 = vmatmul.mubr.bf16.gmra.mrb[0].mxu0 %v1044
        %v1080 = vpop.f32.mrb[0].mxu0
        %v1081 = vadd.f32 %v1030, %v1080
        %v1082 = vpop.f32.mrb[0].mxu0
        %v1083 = vpop.f32.mrb[0].mxu0
        %v1084 = vpop.f32.mrb[0].mxu0
        %1085 = vdwg.mxu0
        %v1086 = vadd.f32 %v248, %v1081
        %v1087 = vsel %vm250, %v1086, 0.0
        %1088 = vadd.xlane.f32.xlu0 %v1087
        %v1089 = vpop.xlane.xlu0 %1088
        %v1090 = vmul.f32 %v1089, %v254
        %v1091 = vsub.f32 %v1086, %v1090
        %v1092 = vmul.f32 %v1091, %v1091
        %v1093 = vsel %vm250, %v1092, 0.0
        %1094 = vadd.xlane.f32.xlu0 %v1093
        %v1095 = vpop.xlane.xlu0 %1094
        %v1096 = vmul.f32 %v1095, %v254
        %v1097 = vadd.f32 %v1096, 1e-05
        %v1098 = vrsqrt.pop %v1097
        %v1099 = vmul.f32 %v1091, %v1098
        %v1100 = vlaneseq
        %v1101 = vshrl.u32 %v1100, 7
        %v1102 = vsub.s32 2, %v1101
        %v1103 = vrot.slane %v249, %v1102
        %v1104 = vmul.f32 %v1099, %v1103
        %v1105 = vlaneseq
        %v1106 = vshrl.u32 %v1105, 7
        %v1107 = vsub.s32 3, %v1106
        %v1108 = vrot.slane %v249, %v1107
        %v1109 = vadd.f32 %v1104, %v1108
        %v1110 = vpack.c.bf16 %v1109, %v1109
        %v1111 = vld [vmem:[%s4] sm:$0xf]
        %v1112 = vld [vmem:[%s4 + $0x4] sm:$0xf]
        %v1113 = vld [vmem:[%s4 + $0x8] sm:$0xf]
        %v1114 = vld [vmem:[%s4 + $0xc] sm:$0xf]
        %v1115 = vlaneseq
        %v1116 = vshrl.u32 %v1115, 7
        %v1117 = vsub.s32 7, %v1116
        %v1118 = vrot.slane %v249, %v1117
        %v1123 = vunpack.c.l.b16 %v1111
        %v1124 = vunpack.c.l.b16 %v1112
        %v1125 = vunpack.c.l.b16 %v1113
        %v1126 = vunpack.c.l.b16 %v1114
        %v1127 = vpack.c.b16 %v1124, %v1123
        %v1128 = vpack.c.b16 %v1126, %v1125
        %v1132 = vsel %vm250, %v1110, 0
        %1134 = vmatprep.subr.bf16.mxu0 0
        %1135 = vmatpush1.bf16.msra.mxu0 %v1127
        %1136 = vmatprep.subr.bf16.mxu0 0
        %1137 = vmatpush1.bf16.msra.mxu0 %v1128
        %1138 = vmatprep.subr.bf16.mxu0 0
        %1139 = vmatpush1.bf16.msra.mxu0 0
        %1140 = vmatprep.subr.bf16.mxu0 0
        %1141 = vmatpush1.bf16.msra.mxu0 0
        %1142 = vmatprep.subr.bf16.mxu0 0
        %1143 = vmatpush1.bf16.msra.mxu0 0
        %1144 = vmatprep.subr.bf16.mxu0 0
        %1145 = vmatpush1.bf16.msra.mxu0 0
        %1146 = vmatprep.subr.bf16.mxu0 0
        %1147 = vmatpush1.bf16.msra.mxu0 0
        %1148 = vmatprep.subr.bf16.mxu0 0
        %1149 = vmatpush1.bf16.msra.mxu0 0
        %1150 = vmatprep.subr.bf16.mxu0 0
        %1151 = vmatpush1.bf16.msra.mxu0 0
        %1152 = vmatprep.subr.bf16.mxu0 0
        %1153 = vmatpush1.bf16.msra.mxu0 0
        %1154 = vmatprep.subr.bf16.mxu0 0
        %1155 = vmatpush1.bf16.msra.mxu0 0
        %1156 = vmatprep.subr.bf16.mxu0 0
        %1157 = vmatpush1.bf16.msra.mxu0 0
        %1158 = vmatprep.subr.bf16.mxu0 0
        %1159 = vmatpush1.bf16.msra.mxu0 0
        %1160 = vmatprep.subr.bf16.mxu0 0
        %1161 = vmatpush1.bf16.msra.mxu0 0
        %1162 = vmatprep.subr.bf16.mxu0 0
        %1163 = vmatpush1.bf16.msra.mxu0 0
        %1164 = vmatprep.subr.bf16.mxu0 0
        %1165 = vmatpush1.bf16.msra.mxu0 0
        %1166 = vmatprep.mubr.bf16.mxu0 0
        %1167 = vmatmul.mubr.bf16.gmra.mrb[0].mxu0 %v1132
        %v1168 = vpop.f32.mrb[0].mxu0
        %v1169 = vadd.f32 %v1118, %v1168
        %v1170 = vpop.f32.mrb[0].mxu0
        %v1171 = vpop.f32.mrb[0].mxu0
        %v1172 = vpop.f32.mrb[0].mxu0
        %1173 = vdwg.mxu0
        %v1174 = vmul.f32 %v1169, 0.5
        %v1175 = vmul.f32 %v1169, 0.044715
        %v1176 = vmul.f32 %v1175, %v1169
        %v1177 = vmul.f32 %v1176, %v1169
        %v1178 = vadd.f32 %v1169, %v1177
        %v1179 = vmul.f32 %v1178, 0.7978846
        %v1180 = vtanh.pop %v1179
        %v1181 = vadd.f32 %v1180, 1.0
        %v1182 = vmul.f32 %v1174, %v1181
        %v1183 = vpack.c.bf16 %v1182, %v1182
        %v1184 = vld [vmem:[%s5] sm:$0xf]
        %v1185 = vld [vmem:[%s5 + $0x4] sm:$0xf]
        %v1186 = vld [vmem:[%s5 + $0x8] sm:$0xf]
        %v1187 = vld [vmem:[%s5 + $0xc] sm:$0xf]
        %v1188 = vld [vmem:[%s5 + $0x10] sm:$0xf]
        %v1189 = vld [vmem:[%s5 + $0x14] sm:$0xf]
        %v1190 = vld [vmem:[%s5 + $0x18] sm:$0xf]
        %v1191 = vld [vmem:[%s5 + $0x1c] sm:$0xf]
        %v1192 = vld [vmem:[%s5 + $0x20] sm:$0xf]
        %v1193 = vld [vmem:[%s5 + $0x24] sm:$0xf]
        %v1194 = vld [vmem:[%s5 + $0x28] sm:$0xf]
        %v1195 = vld [vmem:[%s5 + $0x2c] sm:$0xf]
        %v1196 = vld [vmem:[%s5 + $0x30] sm:$0xf]
        %v1197 = vld [vmem:[%s5 + $0x34] sm:$0xf]
        %v1198 = vld [vmem:[%s5 + $0x38] sm:$0xf]
        %v1199 = vld [vmem:[%s5 + $0x3c] sm:$0xf]
        %v1200 = vlaneseq
        %v1201 = vshrl.u32 %v1200, 7
        %v1202 = vsub.s32 5, %v1201
        %v1203 = vrot.slane %v249, %v1202
        %v1220 = vunpack.c.l.b16 %v1184
        %v1221 = vunpack.c.l.b16 %v1185
        %v1222 = vunpack.c.l.b16 %v1186
        %v1223 = vunpack.c.l.b16 %v1187
        %v1224 = vunpack.c.l.b16 %v1188
        %v1225 = vunpack.c.l.b16 %v1189
        %v1226 = vunpack.c.l.b16 %v1190
        %v1227 = vunpack.c.l.b16 %v1191
        %v1228 = vunpack.c.l.b16 %v1192
        %v1229 = vunpack.c.l.b16 %v1193
        %v1230 = vunpack.c.l.b16 %v1194
        %v1231 = vunpack.c.l.b16 %v1195
        %v1232 = vunpack.c.l.b16 %v1196
        %v1233 = vunpack.c.l.b16 %v1197
        %v1234 = vunpack.c.l.b16 %v1198
        %v1235 = vunpack.c.l.b16 %v1199
        %v1236 = vpack.c.b16 %v1221, %v1220
        %v1237 = vpack.c.b16 %v1223, %v1222
        %v1238 = vpack.c.b16 %v1225, %v1224
        %v1239 = vpack.c.b16 %v1227, %v1226
        %v1240 = vpack.c.b16 %v1229, %v1228
        %v1241 = vpack.c.b16 %v1231, %v1230
        %v1242 = vpack.c.b16 %v1233, %v1232
        %v1243 = vpack.c.b16 %v1235, %v1234
        %1252 = vmatprep.subr.bf16.mxu0 0
        %1253 = vmatpush1.bf16.msra.mxu0 %v1236
        %1254 = vmatprep.subr.bf16.mxu0 0
        %1255 = vmatpush1.bf16.msra.mxu0 %v1237
        %1256 = vmatprep.subr.bf16.mxu0 0
        %1257 = vmatpush1.bf16.msra.mxu0 %v1238
        %1258 = vmatprep.subr.bf16.mxu0 0
        %1259 = vmatpush1.bf16.msra.mxu0 %v1239
        %1260 = vmatprep.subr.bf16.mxu0 0
        %1261 = vmatpush1.bf16.msra.mxu0 %v1240
        %1262 = vmatprep.subr.bf16.mxu0 0
        %1263 = vmatpush1.bf16.msra.mxu0 %v1241
        %1264 = vmatprep.subr.bf16.mxu0 0
        %1265 = vmatpush1.bf16.msra.mxu0 %v1242
        %1266 = vmatprep.subr.bf16.mxu0 0
        %1267 = vmatpush1.bf16.msra.mxu0 %v1243
        %1268 = vmatprep.subr.bf16.mxu0 0
        %1269 = vmatpush1.bf16.msra.mxu0 0
        %1270 = vmatprep.subr.bf16.mxu0 0
        %1271 = vmatpush1.bf16.msra.mxu0 0
        %1272 = vmatprep.subr.bf16.mxu0 0
        %1273 = vmatpush1.bf16.msra.mxu0 0
        %1274 = vmatprep.subr.bf16.mxu0 0
        %1275 = vmatpush1.bf16.msra.mxu0 0
        %1276 = vmatprep.subr.bf16.mxu0 0
        %1277 = vmatpush1.bf16.msra.mxu0 0
        %1278 = vmatprep.subr.bf16.mxu0 0
        %1279 = vmatpush1.bf16.msra.mxu0 0
        %1280 = vmatprep.subr.bf16.mxu0 0
        %1281 = vmatpush1.bf16.msra.mxu0 0
        %1282 = vmatprep.subr.bf16.mxu0 0
        %1283 = vmatpush1.bf16.msra.mxu0 0
        %1284 = vmatprep.mubr.bf16.mxu0 0
        %1285 = vmatmul.mubr.bf16.gmra.mrb[0].mxu0 %v1183
        %v1286 = vpop.f32.mrb[0].mxu0
        %v1287 = vadd.f32 %v1203, %v1286
        %v1288 = vpop.f32.mrb[0].mxu0
        %v1289 = vpop.f32.mrb[0].mxu0
        %v1290 = vpop.f32.mrb[0].mxu0
        %1291 = vdwg.mxu0
        %v1292 = vadd.f32 %v1086, %v1287
        %1293 = vst.msk [vmem:[%s242] sm:$0xff] %vm250, %v1292
        %s1294 = sand.u32 %s159, 1
        %s1295 = scalar_lea.sflag [#allocation3], %s1294
        %s1296 = sand.u32 %s159, 1
        %s1297 = smul.addr %s1296, 8
        %s1298 = scalar_lea.vmem [#allocation2], %s1297
        // Predicated region
        $region45: #{block_forward.1} parent=43 // pred_check
          %p1299 = pneg %p169
        $region46: #{block_forward.1} parent=43 // pred_check_branch
          %1301 = sbr.rel (%p1299) target = $region48
        $region47: #{block_forward.1} parent=43 // pred_region
          %s1303 = ssub.s32 128, 128
          %1304 = vsyncadd %s1295, %s1303
          %s1305 = smul.addr %s20, 128
          %s1306 = scalar_lea.hbm %s6, %s1305
          %s1308 = sshll.u32 %s1298, 4
          %s1309 = int_to_ptr.vmem [resolvable:$true] %s1308
          %1311 = dma.vmem_to_hbm [thread:$0]  %s1309, 128, %s1306, %s1295
        $region48: #{block_forward.1} parent=43 // pred_fallthru
          _
      $region44: #{block_forward.1} parent=5 // pred_fallthru
        _
      %p1312 = scmp.le.s32.totalorder 2, %s15
      // Predicated region
      $region49: #{block_forward.1} parent=5 // pred_check
        %p1313 = pneg %p1312
      $region50: #{block_forward.1} parent=5 // pred_check_branch
        %1315 = sbr.rel (%p1313) target = $region52
      $region51: #{block_forward.1} parent=5 // pred_region
        %s1316 = ssub.s32 %s15, 2
        // Predicated region
        $region53: #{block_forward.1} parent=51 // pred_check
          %p1317 = pneg %p175
        $region54: #{block_forward.1} parent=51 // pred_check_branch
          %1319 = sbr.rel (%p1317) target = $region56
        $region55: #{block_forward.1} parent=51 // pred_region
          %s1320 = sand.u32 %s160, 1
          %s1321 = scalar_lea.sflag [#allocation3], %s1320
          %s1322 = sand.u32 %s160, 1
          %s1323 = smul.addr %s1322, 8
          %s1324 = scalar_lea.vmem [#allocation2], %s1323
          %1325 = dma.done %s1321, 128
        $region56: #{block_forward.1} parent=51 // pred_fallthru
          _
      $region52: #{block_forward.1} parent=5 // pred_fallthru
        _
    $region6: #{block_forward.1} parent=1 // loop_footer
      %s19 = sadd.s32 1, %s15
    $region7: #{block_forward.1} parent=1 // loop_footer_branch
      %14 = sbr.rel target = $region3
    $region8: #{block_forward.1} parent=1 // loop_exit
      _
    %1326 = vsyncpa [#allocation3], 1
    %s1327 = scalar_lea.sflag [#allocation3], 1
    %1328 = vsyncpa %s1327, 1

</llo_original>
